<compile_context>
chip_gen: v7x
topology: tpu7x:2x2x1
jax: 0.10.0
libtpu: 0.0.40
codegen_flags: <defaults>
</compile_context>

<pallas_src>
import jax
import jax.numpy as jnp
from jax.experimental import pallas as pl
from jax.experimental.pallas import tpu as pltpu


def _round_up(n: int, m: int) -> int:
    return ((n + m - 1) // m) * m


def _vmem_capacity_bytes() -> int:
    """Per-generation VMEM capacity; conservative 64 MiB (v7x per-TC) fallback."""
    try:
        info = pltpu.get_tpu_info()
        cap = int(getattr(info, "vmem_capacity_bytes", 0) or 0)
        if cap > 0:
            return cap
    except Exception:
        pass
    return 64 * 1024 * 1024


def make_cheb_kernel(T: int, hid: int, tb: int, slab: int):
    n_slabs = tb // slab

    def cheb_kernel(x_ref, w0_ref, b0_ref, w2_ref, b2_ref, o_ref, h_ref, cheb_ref):
        # ---- fc0: one full-tile MXU dot (bf16 operands, f32 accumulate);
        #      bias add + tanh stay f32 (VPU/EUP). h kept in f32 VMEM scratch. ----
        h_ref[...] = jnp.tanh(
            jnp.dot(x_ref[...], w0_ref[...], preferred_element_type=jnp.float32)
            + b0_ref[...]
        )

        # ---- Chebyshev-style recurrence (mirrors the PyTorch loop: h_prev seeded 0),
        #      processed in row slabs so the live set stays well under 64 vregs.
        #      Each term lands in a lane-contiguous slice of the bf16 cheb scratch. ----
        for s in range(n_slabs):
            r0, r1 = s * slab, (s + 1) * slab
            h = h_ref[r0:r1, :]                           # f32 slab
            cheb_ref[r0:r1, 0:hid] = h.astype(cheb_ref.dtype)
            two_h = 2.0 * h                               # hoisted out of the k-loop
            h_prev = jnp.zeros_like(h)
            h_curr = h
            for k in range(1, T + 1):
                h_next = two_h * h_curr - h_prev
                cheb_ref[r0:r1, k * hid:(k + 1) * hid] = h_next.astype(cheb_ref.dtype)
                h_prev, h_curr = h_curr, h_next

        # ---- fc2: single fused (tb, hid*(T+1)) @ (hid*(T+1), out_pad) contraction ----
        acc = jnp.dot(cheb_ref[...], w2_ref[...], preferred_element_type=jnp.float32)
        o_ref[...] = (acc + b2_ref[...]).astype(o_ref.dtype)

    return cheb_kernel


def chebyshev_mlp_forward(x, w0, b0, w2, b2, *, T: int, hid: int, out_dim: int,
                          tile_b: int = 256, compute_dtype=jnp.bfloat16):
    """x: (B, ...) -> flattened to (B, in_dim). Returns (B, out_dim) float32."""
    B = x.shape[0]
    in_dim = 1
    for d in x.shape[1:]:
        in_dim *= d
    k_dim = hid * (T + 1)

    # Lane-dense output: pad fc2 columns to a multiple of 128 -> unmasked full-width
    # stores in the kernel; the extra zero columns are sliced off after the call.
    out_pad = _round_up(max(out_dim, 128), 128)
    w2p = jnp.pad(w2, ((0, 0), (0, out_pad - out_dim))) if out_pad != out_dim else w2
    b2p = jnp.pad(b2, ((0, out_pad - out_dim),)) if out_pad != out_dim else b2

    # ---- batch tile selection (multiples of 16 for bf16 sublane packing) ----
    b16 = _round_up(max(B, 1), 16)
    tb = min(tile_b, b16)
    # If everything fits in one tile but there is enough work, split into two tiles so
    # v7x's two TensorCores both get a batch tile (dimension_semantics="parallel").
    if tb == b16 and b16 >= 128:
        tb = _round_up((b16 + 1) // 2, 16)

    isz = jnp.dtype(compute_dtype).itemsize

    def footprint(t: int) -> int:
        return (
            2 * t * in_dim * isz            # x tile, double-buffered
            + 2 * t * out_pad * 4           # out tile (f32), double-buffered
            + 2 * in_dim * hid * isz        # w0 (conservatively x2)
            + 2 * k_dim * out_pad * isz     # w2 (conservatively x2)
            + 2 * (hid + out_pad) * 4       # biases
            + t * hid * 4                   # h scratch (f32)
            + t * k_dim * isz               # cheb scratch (bf16)
        )

    vmem_cap = _vmem_capacity_bytes()
    budget = int(vmem_cap * 0.7)
    # Shrink the batch tile instead of clamping the VMEM limit.
    while footprint(tb) > budget and tb > 16:
        tb = max(16, _round_up(tb // 2, 16))
    vmem_limit = int(min(max(1.3 * footprint(tb), 4 * 1024 * 1024), 0.9 * vmem_cap))

    b_pad = _round_up(B, tb)

    # Row-slab size for the recurrence (keeps the VPU live set under the vreg file).
    slab = 64
    while tb % slab:
        slab //= 2

    # ---- single-pass preprocessing: reshape -> bf16 cast -> pad (no extra f32 pass) ----
    x_flat = x.reshape(B, in_dim)
    if x_flat.dtype != compute_dtype:
        x_flat = x_flat.astype(compute_dtype)
    if b_pad != B:
        x_flat = jnp.pad(x_flat, ((0, b_pad - B), (0, 0)))

    w0_c = w0.astype(compute_dtype)
    w2_c = w2p.astype(compute_dtype)
    b0_r = b0.reshape(1, hid).astype(jnp.float32)
    b2_r = b2p.reshape(1, out_pad).astype(jnp.float32)

    grid = (b_pad // tb,)
    kernel = make_cheb_kernel(T, hid, tb, slab)

    cost = pl.CostEstimate(
        flops=int(2 * b_pad * (in_dim * hid + k_dim * out_pad) + 3 * b_pad * hid * T),
        transcendentals=int(b_pad * hid),
        bytes_accessed=int(
            b_pad * in_dim * isz + b_pad * out_pad * 4
            + in_dim * hid * isz + k_dim * out_pad * isz + (hid + out_pad) * 4
        ),
    )

    def build(single_buffer_weights: bool):
        # Resident weights/biases: constant index_map; optionally single-buffered
        # (halves resident-weight VMEM, matters most under v7x's 64 MiB/TC).
        res = {"pipeline_mode": pl.Buffered(1)} if single_buffer_weights else {}
        return pl.pallas_call(
            kernel,
            out_shape=jax.ShapeDtypeStruct((b_pad, out_pad), jnp.float32),
            grid_spec=pltpu.PrefetchScalarGridSpec(
                num_scalar_prefetch=0,
                grid=grid,
                in_specs=[
                    pl.BlockSpec((tb, in_dim), lambda i: (i, 0)),            # x tile
                    pl.BlockSpec((in_dim, hid), lambda i: (0, 0), **res),    # w0
                    pl.BlockSpec((1, hid), lambda i: (0, 0), **res),         # b0
                    pl.BlockSpec((k_dim, out_pad), lambda i: (0, 0), **res), # w2
                    pl.BlockSpec((1, out_pad), lambda i: (0, 0), **res),     # b2
                ],
                out_specs=pl.BlockSpec((tb, out_pad), lambda i: (i, 0)),
                scratch_shapes=[
                    pltpu.VMEM((tb, hid), jnp.float32),      # f32 h (recurrence input)
                    pltpu.VMEM((tb, k_dim), compute_dtype),  # fused Chebyshev features
                ],
            ),
            compiler_params=pltpu.CompilerParams(
                dimension_semantics=("parallel",),  # shard batch tiles over v7x's 2 TCs
                vmem_limit_bytes=vmem_limit,
            ),
            cost_estimate=cost,
        )

    args = (x_flat, w0_c, b0_r, w2_c, b2_r)
    try:
        out = build(True)(*args)       # preferred: single-buffered resident weights
    except Exception:
        out = build(False)(*args)      # fallback if pipeline_mode/Buffered unsupported

    # NOTE: the slice fuses away when this wrapper is jitted by the consumer.
    return out[:B, :out_dim]


def reference_forward(x, w0, b0, w2, b2, *, T: int, compute_dtype=jnp.bfloat16):
    """Pure-JAX reference with the same bf16-operand / f32-accumulate semantics."""
    B = x.shape[0]
    xf = x.reshape(B, -1).astype(jnp.float32)
    h = jnp.tanh(
        jnp.dot(xf.astype(compute_dtype), w0.astype(compute_dtype),
                preferred_element_type=jnp.float32)
        + b0.astype(jnp.float32)
    )
    cheb = [h]
    two_h = 2.0 * h
    h_prev = jnp.zeros_like(h)
    h_curr = h
    for _ in range(1, T + 1):
        h_next = two_h * h_curr - h_prev
        cheb.append(h_next)
        h_prev, h_curr = h_curr, h_next
    feats = jnp.concatenate(cheb, axis=1).astype(compute_dtype)
    return (
        jnp.dot(feats, w2.astype(compute_dtype), preferred_element_type=jnp.float32)
        + b2.astype(jnp.float32)
    )


if __name__ == "__main__":
    # Small shapes consistent with the module's forward:
    # batch=8, x flattens to in_dim=256, hid=128, out_dim=10 (module default), T=5.
    B, C, H, W = 8, 4, 8, 8
    in_dim = C * H * W          # 256
    hid = 128
    out_dim = 10
    T = 5

    key = jax.random.PRNGKey(0)
    k_x, k_w0, k_b0, k_w2, k_b2 = jax.random.split(key, 5)

    x = jax.random.normal(k_x, (B, C, H, W), dtype=jnp.float32)

    # Deterministic init mimicking nn.Linear defaults: U(-1/sqrt(fan_in), 1/sqrt(fan_in)).
    bound0 = 1.0 / jnp.sqrt(in_dim)
    w0 = jax.random.uniform(k_w0, (in_dim, hid), jnp.float32, -bound0, bound0)
    b0 = jax.random.uniform(k_b0, (hid,), jnp.float32, -bound0, bound0)

    fan_in2 = hid * (T + 1)
    bound2 = 1.0 / jnp.sqrt(fan_in2)
    w2 = jax.random.uniform(k_w2, (fan_in2, out_dim), jnp.float32, -bound2, bound2)
    b2 = jax.random.uniform(k_b2, (out_dim,), jnp.float32, -bound2, bound2)

    # dropout_p=0.0 and use_batchnorm=False (module defaults) -> both are no-ops.
    out = chebyshev_mlp_forward(x, w0, b0, w2, b2, T=T, hid=hid, out_dim=out_dim)
    out = jax.block_until_ready(out)

    ref = reference_forward(x, w0, b0, w2, b2, T=T)
    assert out.shape == (B, out_dim)
    max_diff = float(jnp.max(jnp.abs(out - ref)))
    assert jnp.allclose(out, ref, atol=5e-3, rtol=5e-3), f"mismatch, max|diff|={max_diff}"

    print("KERNEL_OK")
</pallas_src>

<mosaic_0001>
module attributes {stable_mosaic.version = 11 : i64} {
  func.func @cheb_kernel(%arg0: i32, %arg1: memref<16x256xbf16, #tpu.memory_space<vmem>>, %arg2: memref<256x128xbf16, #tpu.memory_space<vmem>>, %arg3: memref<1x128xf32, #tpu.memory_space<vmem>>, %arg4: memref<768x128xbf16, #tpu.memory_space<vmem>>, %arg5: memref<1x128xf32, #tpu.memory_space<vmem>>, %arg6: memref<16x128xf32, #tpu.memory_space<vmem>>, %arg7: memref<16x128xf32, #tpu.memory_space<vmem>>, %arg8: memref<16x768xbf16, #tpu.memory_space<vmem>>) attributes {dimension_semantics = [#tpu.dimension_semantics<parallel>], iteration_bounds = array<i64: 1>, scalar_prefetch = 0 : i64, scratch_operands = 2 : i64, tpu.core_type = #tpu.core_type<tc>, window_params = [{transform_indices = @transform_0, window_bounds = array<i64: 16, 256>}, {pipeline_mode = #tpu.pipeline_mode<synchronous>, transform_indices = @transform_1, window_bounds = array<i64: 256, 128>}, {pipeline_mode = #tpu.pipeline_mode<synchronous>, transform_indices = @transform_2, window_bounds = array<i64: 1, 128>}, {pipeline_mode = #tpu.pipeline_mode<synchronous>, transform_indices = @transform_3, window_bounds = array<i64: 768, 128>}, {pipeline_mode = #tpu.pipeline_mode<synchronous>, transform_indices = @transform_4, window_bounds = array<i64: 1, 128>}, {transform_indices = @transform_5, window_bounds = array<i64: 16, 128>}]} {
    %c0 = arith.constant 0 : index
    %c0_0 = arith.constant 0 : index
    %0 = vector.load %arg1[%c0, %c0_0] : memref<16x256xbf16, #tpu.memory_space<vmem>>, vector<16x256xbf16>
    %c0_1 = arith.constant 0 : index
    %c0_2 = arith.constant 0 : index
    %1 = vector.load %arg2[%c0_1, %c0_2] : memref<256x128xbf16, #tpu.memory_space<vmem>>, vector<256x128xbf16>
    %cst = arith.constant dense<0.000000e+00> : vector<16x128xf32>
    %2 = tpu.matmul %0, %1, %cst {dimension_numbers = #tpu.dot_dimension_numbers<[1], [0], [0], [1], [0, 0, 1, 1], [], []>} : vector<16x256xbf16>, vector<256x128xbf16>, vector<16x128xf32> -> vector<16x128xf32>
    %c0_3 = arith.constant 0 : index
    %c0_4 = arith.constant 0 : index
    %3 = vector.load %arg3[%c0_3, %c0_4] : memref<1x128xf32, #tpu.memory_space<vmem>>, vector<1x128xf32>
    %4 = vector.broadcast %3 : vector<1x128xf32> to vector<16x128xf32>
    %5 = arith.addf %2, %4 : vector<16x128xf32>
    %6 = math.tanh %5 : vector<16x128xf32>
    %c0_5 = arith.constant 0 : index
    %c0_6 = arith.constant 0 : index
    %7 = vector.load %arg7[%c0_5, %c0_6] : memref<16x128xf32, #tpu.memory_space<vmem>>, vector<16x128xf32>
    tpu.vector_store %arg7[%c0_5, %c0_6], %6 {strides = array<i32>} : memref<16x128xf32, #tpu.memory_space<vmem>>, vector<16x128xf32>,
    %c0_7 = arith.constant 0 : index
    %c0_8 = arith.constant 0 : index
    %8 = vector.load %arg7[%c0_7, %c0_8] : memref<16x128xf32, #tpu.memory_space<vmem>>, vector<16x128xf32>
    %9 = arith.truncf %8 : vector<16x128xf32> to vector<16x128xbf16>
    %c0_9 = arith.constant 0 : index
    %c0_10 = arith.constant 0 : index
    %10 = vector.load %arg8[%c0_9, %c0_10] : memref<16x768xbf16, #tpu.memory_space<vmem>>, vector<16x128xbf16>
    tpu.vector_store %arg8[%c0_9, %c0_10], %9 {strides = array<i32>} : memref<16x768xbf16, #tpu.memory_space<vmem>>, vector<16x128xbf16>,
    %cst_11 = arith.constant 2.000000e+00 : f32
    %11 = vector.broadcast %cst_11 : f32 to vector<16x128xf32>
    %12 = arith.mulf %11, %8 : vector<16x128xf32>
    %cst_12 = arith.constant 0.000000e+00 : f32
    %13 = vector.broadcast %cst_12 : f32 to vector<16x128xf32>
    %14 = arith.mulf %12, %8 : vector<16x128xf32>
    %15 = arith.subf %14, %13 : vector<16x128xf32>
    %16 = arith.truncf %15 : vector<16x128xf32> to vector<16x128xbf16>
    %c0_13 = arith.constant 0 : index
    %c128 = arith.constant 128 : index
    %17 = vector.load %arg8[%c0_13, %c128] : memref<16x768xbf16, #tpu.memory_space<vmem>>, vector<16x128xbf16>
    tpu.vector_store %arg8[%c0_13, %c128], %16 {strides = array<i32>} : memref<16x768xbf16, #tpu.memory_space<vmem>>, vector<16x128xbf16>,
    %18 = arith.mulf %12, %15 : vector<16x128xf32>
    %19 = arith.subf %18, %8 : vector<16x128xf32>
    %20 = arith.truncf %19 : vector<16x128xf32> to vector<16x128xbf16>
    %c0_14 = arith.constant 0 : index
    %c256 = arith.constant 256 : index
    %21 = vector.load %arg8[%c0_14, %c256] : memref<16x768xbf16, #tpu.memory_space<vmem>>, vector<16x128xbf16>
    tpu.vector_store %arg8[%c0_14, %c256], %20 {strides = array<i32>} : memref<16x768xbf16, #tpu.memory_space<vmem>>, vector<16x128xbf16>,
    %22 = arith.mulf %12, %19 : vector<16x128xf32>
    %23 = arith.subf %22, %15 : vector<16x128xf32>
    %24 = arith.truncf %23 : vector<16x128xf32> to vector<16x128xbf16>
    %c0_15 = arith.constant 0 : index
    %c384 = arith.constant 384 : index
    %25 = vector.load %arg8[%c0_15, %c384] : memref<16x768xbf16, #tpu.memory_space<vmem>>, vector<16x128xbf16>
    tpu.vector_store %arg8[%c0_15, %c384], %24 {strides = array<i32>} : memref<16x768xbf16, #tpu.memory_space<vmem>>, vector<16x128xbf16>,
    %26 = arith.mulf %12, %23 : vector<16x128xf32>
    %27 = arith.subf %26, %19 : vector<16x128xf32>
    %28 = arith.truncf %27 : vector<16x128xf32> to vector<16x128xbf16>
    %c0_16 = arith.constant 0 : index
    %c512 = arith.constant 512 : index
    %29 = vector.load %arg8[%c0_16, %c512] : memref<16x768xbf16, #tpu.memory_space<vmem>>, vector<16x128xbf16>
    tpu.vector_store %arg8[%c0_16, %c512], %28 {strides = array<i32>} : memref<16x768xbf16, #tpu.memory_space<vmem>>, vector<16x128xbf16>,
    %30 = arith.mulf %12, %27 : vector<16x128xf32>
    %31 = arith.subf %30, %23 : vector<16x128xf32>
    %32 = arith.truncf %31 : vector<16x128xf32> to vector<16x128xbf16>
    %c0_17 = arith.constant 0 : index
    %c640 = arith.constant 640 : index
    %33 = vector.load %arg8[%c0_17, %c640] : memref<16x768xbf16, #tpu.memory_space<vmem>>, vector<16x128xbf16>
    tpu.vector_store %arg8[%c0_17, %c640], %32 {strides = array<i32>} : memref<16x768xbf16, #tpu.memory_space<vmem>>, vector<16x128xbf16>,
    %c0_18 = arith.constant 0 : index
    %c0_19 = arith.constant 0 : index
    %34 = vector.load %arg8[%c0_18, %c0_19] : memref<16x768xbf16, #tpu.memory_space<vmem>>, vector<16x768xbf16>
    %c0_20 = arith.constant 0 : index
    %c0_21 = arith.constant 0 : index
    %35 = vector.load %arg4[%c0_20, %c0_21] : memref<768x128xbf16, #tpu.memory_space<vmem>>, vector<768x128xbf16>
    %cst_22 = arith.constant dense<0.000000e+00> : vector<16x128xf32>
    %36 = tpu.matmul %34, %35, %cst_22 {dimension_numbers = #tpu.dot_dimension_numbers<[1], [0], [0], [1], [0, 0, 1, 1], [], []>} : vector<16x768xbf16>, vector<768x128xbf16>, vector<16x128xf32> -> vector<16x128xf32>
    %c0_23 = arith.constant 0 : index
    %c0_24 = arith.constant 0 : index
    %37 = vector.load %arg5[%c0_23, %c0_24] : memref<1x128xf32, #tpu.memory_space<vmem>>, vector<1x128xf32>
    %38 = vector.broadcast %37 : vector<1x128xf32> to vector<16x128xf32>
    %39 = arith.addf %36, %38 : vector<16x128xf32>
    %c0_25 = arith.constant 0 : index
    %c0_26 = arith.constant 0 : index
    %40 = vector.load %arg6[%c0_25, %c0_26] : memref<16x128xf32, #tpu.memory_space<vmem>>, vector<16x128xf32>
    tpu.vector_store %arg6[%c0_25, %c0_26], %39 {strides = array<i32>} : memref<16x128xf32, #tpu.memory_space<vmem>>, vector<16x128xf32>,
    return
  }
  func.func @transform_0(%arg0: i32) -> (i32, i32) {
    %c0_i32 = arith.constant 0 : i32
    %c0_i32_0 = arith.constant 0 : i32
    return %arg0, %c0_i32 : i32, i32
  }
  func.func @transform_1(%arg0: i32) -> (i32, i32) {
    %c0_i32 = arith.constant 0 : i32
    %c0_i32_0 = arith.constant 0 : i32
    %c0_i32_1 = arith.constant 0 : i32
    return %c0_i32, %c0_i32_0 : i32, i32
  }
  func.func @transform_2(%arg0: i32) -> (i32, i32) {
    %c0_i32 = arith.constant 0 : i32
    %c0_i32_0 = arith.constant 0 : i32
    %c0_i32_1 = arith.constant 0 : i32
    return %c0_i32, %c0_i32_0 : i32, i32
  }
  func.func @transform_3(%arg0: i32) -> (i32, i32) {
    %c0_i32 = arith.constant 0 : i32
    %c0_i32_0 = arith.constant 0 : i32
    %c0_i32_1 = arith.constant 0 : i32
    return %c0_i32, %c0_i32_0 : i32, i32
  }
  func.func @transform_4(%arg0: i32) -> (i32, i32) {
    %c0_i32 = arith.constant 0 : i32
    %c0_i32_0 = arith.constant 0 : i32
    %c0_i32_1 = arith.constant 0 : i32
    return %c0_i32, %c0_i32_0 : i32, i32
  }
  func.func @transform_5(%arg0: i32) -> (i32, i32) {
    %c0_i32 = arith.constant 0 : i32
    %c0_i32_0 = arith.constant 0 : i32
    return %arg0, %c0_i32 : i32, i32
  }
}

module attributes {stable_mosaic.version = 11 : i64} {
  func.func @cheb_kernel(%arg0: i32, %arg1: memref<16x256xbf16, #tpu.memory_space<vmem>>, %arg2: memref<256x128xbf16, #tpu.memory_space<vmem>>, %arg3: memref<1x128xf32, #tpu.memory_space<vmem>>, %arg4: memref<768x128xbf16, #tpu.memory_space<vmem>>, %arg5: memref<1x128xf32, #tpu.memory_space<vmem>>, %arg6: memref<16x128xf32, #tpu.memory_space<vmem>>, %arg7: memref<16x128xf32, #tpu.memory_space<vmem>>, %arg8: memref<16x768xbf16, #tpu.memory_space<vmem>>) attributes {dimension_semantics = [#tpu.dimension_semantics<parallel>], iteration_bounds = array<i64: 1>, scalar_prefetch = 0 : i64, scratch_operands = 2 : i64, tpu.core_type = #tpu.core_type<tc>, window_params = [{transform_indices = @transform_0, window_bounds = array<i64: 16, 256>}, {pipeline_mode = #tpu.pipeline_mode<synchronous>, transform_indices = @transform_1, window_bounds = array<i64: 256, 128>}, {pipeline_mode = #tpu.pipeline_mode<synchronous>, transform_indices = @transform_2, window_bounds = array<i64: 1, 128>}, {pipeline_mode = #tpu.pipeline_mode<synchronous>, transform_indices = @transform_3, window_bounds = array<i64: 768, 128>}, {pipeline_mode = #tpu.pipeline_mode<synchronous>, transform_indices = @transform_4, window_bounds = array<i64: 1, 128>}, {transform_indices = @transform_5, window_bounds = array<i64: 16, 128>}]} {
    %c0 = arith.constant 0 : index
    %c0_0 = arith.constant 0 : index
    %0 = vector.load %arg1[%c0, %c0_0] : memref<16x256xbf16, #tpu.memory_space<vmem>>, vector<16x256xbf16>
    %c0_1 = arith.constant 0 : index
    %c0_2 = arith.constant 0 : index
    %1 = vector.load %arg2[%c0_1, %c0_2] : memref<256x128xbf16, #tpu.memory_space<vmem>>, vector<256x128xbf16>
    %cst = arith.constant dense<0.000000e+00> : vector<16x128xf32>
    %2 = tpu.matmul %0, %1, %cst {dimension_numbers = #tpu.dot_dimension_numbers<[1], [0], [0], [1], [0, 0, 1, 1], [], []>} : vector<16x256xbf16>, vector<256x128xbf16>, vector<16x128xf32> -> vector<16x128xf32>
    %c0_3 = arith.constant 0 : index
    %c0_4 = arith.constant 0 : index
    %3 = vector.load %arg3[%c0_3, %c0_4] : memref<1x128xf32, #tpu.memory_space<vmem>>, vector<1x128xf32>
    %4 = vector.broadcast %3 : vector<1x128xf32> to vector<16x128xf32>
    %5 = arith.addf %2, %4 : vector<16x128xf32>
    %6 = math.tanh %5 : vector<16x128xf32>
    %c0_5 = arith.constant 0 : index
    %c0_6 = arith.constant 0 : index
    %7 = vector.load %arg7[%c0_5, %c0_6] : memref<16x128xf32, #tpu.memory_space<vmem>>, vector<16x128xf32>
    tpu.vector_store %arg7[%c0_5, %c0_6], %6 {strides = array<i32>} : memref<16x128xf32, #tpu.memory_space<vmem>>, vector<16x128xf32>,
    %c0_7 = arith.constant 0 : index
    %c0_8 = arith.constant 0 : index
    %8 = vector.load %arg7[%c0_7, %c0_8] : memref<16x128xf32, #tpu.memory_space<vmem>>, vector<16x128xf32>
    %9 = arith.truncf %8 : vector<16x128xf32> to vector<16x128xbf16>
    %c0_9 = arith.constant 0 : index
    %c0_10 = arith.constant 0 : index
    %10 = vector.load %arg8[%c0_9, %c0_10] : memref<16x768xbf16, #tpu.memory_space<vmem>>, vector<16x128xbf16>
    tpu.vector_store %arg8[%c0_9, %c0_10], %9 {strides = array<i32>} : memref<16x768xbf16, #tpu.memory_space<vmem>>, vector<16x128xbf16>,
    %cst_11 = arith.constant 2.000000e+00 : f32
    %11 = vector.broadcast %cst_11 : f32 to vector<16x128xf32>
    %12 = arith.mulf %11, %8 : vector<16x128xf32>
    %cst_12 = arith.constant 0.000000e+00 : f32
    %13 = vector.broadcast %cst_12 : f32 to vector<16x128xf32>
    %14 = arith.mulf %12, %8 : vector<16x128xf32>
    %15 = arith.subf %14, %13 : vector<16x128xf32>
    %16 = arith.truncf %15 : vector<16x128xf32> to vector<16x128xbf16>
    %c0_13 = arith.constant 0 : index
    %c128 = arith.constant 128 : index
    %17 = vector.load %arg8[%c0_13, %c128] : memref<16x768xbf16, #tpu.memory_space<vmem>>, vector<16x128xbf16>
    tpu.vector_store %arg8[%c0_13, %c128], %16 {strides = array<i32>} : memref<16x768xbf16, #tpu.memory_space<vmem>>, vector<16x128xbf16>,
    %18 = arith.mulf %12, %15 : vector<16x128xf32>
    %19 = arith.subf %18, %8 : vector<16x128xf32>
    %20 = arith.truncf %19 : vector<16x128xf32> to vector<16x128xbf16>
    %c0_14 = arith.constant 0 : index
    %c256 = arith.constant 256 : index
    %21 = vector.load %arg8[%c0_14, %c256] : memref<16x768xbf16, #tpu.memory_space<vmem>>, vector<16x128xbf16>
    tpu.vector_store %arg8[%c0_14, %c256], %20 {strides = array<i32>} : memref<16x768xbf16, #tpu.memory_space<vmem>>, vector<16x128xbf16>,
    %22 = arith.mulf %12, %19 : vector<16x128xf32>
    %23 = arith.subf %22, %15 : vector<16x128xf32>
    %24 = arith.truncf %23 : vector<16x128xf32> to vector<16x128xbf16>
    %c0_15 = arith.constant 0 : index
    %c384 = arith.constant 384 : index
    %25 = vector.load %arg8[%c0_15, %c384] : memref<16x768xbf16, #tpu.memory_space<vmem>>, vector<16x128xbf16>
    tpu.vector_store %arg8[%c0_15, %c384], %24 {strides = array<i32>} : memref<16x768xbf16, #tpu.memory_space<vmem>>, vector<16x128xbf16>,
    %26 = arith.mulf %12, %23 : vector<16x128xf32>
    %27 = arith.subf %26, %19 : vector<16x128xf32>
    %28 = arith.truncf %27 : vector<16x128xf32> to vector<16x128xbf16>
    %c0_16 = arith.constant 0 : index
    %c512 = arith.constant 512 : index
    %29 = vector.load %arg8[%c0_16, %c512] : memref<16x768xbf16, #tpu.memory_space<vmem>>, vector<16x128xbf16>
    tpu.vector_store %arg8[%c0_16, %c512], %28 {strides = array<i32>} : memref<16x768xbf16, #tpu.memory_space<vmem>>, vector<16x128xbf16>,
    %30 = arith.mulf %12, %27 : vector<16x128xf32>
    %31 = arith.subf %30, %23 : vector<16x128xf32>
    %32 = arith.truncf %31 : vector<16x128xf32> to vector<16x128xbf16>
    %c0_17 = arith.constant 0 : index
    %c640 = arith.constant 640 : index
    %33 = vector.load %arg8[%c0_17, %c640] : memref<16x768xbf16, #tpu.memory_space<vmem>>, vector<16x128xbf16>
    tpu.vector_store %arg8[%c0_17, %c640], %32 {strides = array<i32>} : memref<16x768xbf16, #tpu.memory_space<vmem>>, vector<16x128xbf16>,
    %c0_18 = arith.constant 0 : index
    %c0_19 = arith.constant 0 : index
    %34 = vector.load %arg8[%c0_18, %c0_19] : memref<16x768xbf16, #tpu.memory_space<vmem>>, vector<16x768xbf16>
    %c0_20 = arith.constant 0 : index
    %c0_21 = arith.constant 0 : index
    %35 = vector.load %arg4[%c0_20, %c0_21] : memref<768x128xbf16, #tpu.memory_space<vmem>>, vector<768x128xbf16>
    %cst_22 = arith.constant dense<0.000000e+00> : vector<16x128xf32>
    %36 = tpu.matmul %34, %35, %cst_22 {dimension_numbers = #tpu.dot_dimension_numbers<[1], [0], [0], [1], [0, 0, 1, 1], [], []>} : vector<16x768xbf16>, vector<768x128xbf16>, vector<16x128xf32> -> vector<16x128xf32>
    %c0_23 = arith.constant 0 : index
    %c0_24 = arith.constant 0 : index
    %37 = vector.load %arg5[%c0_23, %c0_24] : memref<1x128xf32, #tpu.memory_space<vmem>>, vector<1x128xf32>
    %38 = vector.broadcast %37 : vector<1x128xf32> to vector<16x128xf32>
    %39 = arith.addf %36, %38 : vector<16x128xf32>
    %c0_25 = arith.constant 0 : index
    %c0_26 = arith.constant 0 : index
    %40 = vector.load %arg6[%c0_25, %c0_26] : memref<16x128xf32, #tpu.memory_space<vmem>>, vector<16x128xf32>
    tpu.vector_store %arg6[%c0_25, %c0_26], %39 {strides = array<i32>} : memref<16x128xf32, #tpu.memory_space<vmem>>, vector<16x128xf32>,
    return
  }
  func.func @transform_0(%arg0: i32) -> (i32, i32) {
    %c0_i32 = arith.constant 0 : i32
    %c0_i32_0 = arith.constant 0 : i32
    return %arg0, %c0_i32 : i32, i32
  }
  func.func @transform_1(%arg0: i32) -> (i32, i32) {
    %c0_i32 = arith.constant 0 : i32
    %c0_i32_0 = arith.constant 0 : i32
    %c0_i32_1 = arith.constant 0 : i32
    return %c0_i32, %c0_i32_0 : i32, i32
  }
  func.func @transform_2(%arg0: i32) -> (i32, i32) {
    %c0_i32 = arith.constant 0 : i32
    %c0_i32_0 = arith.constant 0 : i32
    %c0_i32_1 = arith.constant 0 : i32
    return %c0_i32, %c0_i32_0 : i32, i32
  }
  func.func @transform_3(%arg0: i32) -> (i32, i32) {
    %c0_i32 = arith.constant 0 : i32
    %c0_i32_0 = arith.constant 0 : i32
    %c0_i32_1 = arith.constant 0 : i32
    return %c0_i32, %c0_i32_0 : i32, i32
  }
  func.func @transform_4(%arg0: i32) -> (i32, i32) {
    %c0_i32 = arith.constant 0 : i32
    %c0_i32_0 = arith.constant 0 : i32
    %c0_i32_1 = arith.constant 0 : i32
    return %c0_i32, %c0_i32_0 : i32, i32
  }
  func.func @transform_5(%arg0: i32) -> (i32, i32) {
    %c0_i32 = arith.constant 0 : i32
    %c0_i32_0 = arith.constant 0 : i32
    return %arg0, %c0_i32 : i32, i32
  }
}

</mosaic_0001>

<llo_original>
// kernel: tpu_custom_call.1
$region0: #{tpu_custom_call.1}
  #allocation0 [shape = 'u32[]', space=smem, size = 0x4, offset = 0x4, fixed_abs, tag = 'smem constant byte address 0x4 - core index']
  #allocation1 [shape = 'u32[144,128]{1,0:T(1,128)}', space=vmem, size = 0x12000, scoped, tag = 'internal scratch']
  #allocation2 [shape = 'f32[16,128]{1,0:T(8,128)}', space=vmem, size = 0x2000, scoped, tag = 'scratch operand']
  #allocation3 [shape = 'bf16[16,768]{1,0:T(16,128)(2,1)}', space=vmem, size = 0x6000, scoped, tag = 'scratch operand']
  %s0 = inlined_call_operand.hbm [shape: bf16[16,256], index: 0, kind: input, shape index: {}]
  %s1 = inlined_call_operand.hbm [shape: bf16[256,128], index: 1, kind: input, shape index: {}]
  %s2 = inlined_call_operand.vmem [shape: f32[1,128], index: 2, kind: input, shape index: {}]
  %s3 = inlined_call_operand.hbm [shape: bf16[768,128], index: 3, kind: input, shape index: {}]
  %s4 = inlined_call_operand.vmem [shape: f32[1,128], index: 4, kind: input, shape index: {}]
  %s5 = inlined_call_operand.hbm [shape: f32[16,128], index: 5, kind: output, shape index: {}]
  %s6 = sld [smem:[#allocation0]]
  $region42: #{tpu_custom_call.1} parent=0
    _
  %s8 = ssub.s32 1, %s6
  %s9 = scalar_select 0, %s8, %s6
  $region1: #{tpu_custom_call.1} parent=0
    #allocation4 [shape = 'u8[8192]{0}', space=vmem, size = 0x2000, scoped, tag = 'input window, operand 0, single buffered']
    #allocation5 [shape = 's32[1]{0}', space=sflag, size = 0x4, scoped, tag = 'scoped memory for tpu_custom_call.1']
    #allocation6 [shape = 's32[1]{0}', space=sflag, size = 0x4, scoped, tag = 'scoped memory for tpu_custom_call.1']
    #allocation7 [shape = 'u8[65536]{0}', space=vmem, size = 0x10000, scoped, tag = 'input window, operand 1, single buffered']
    #allocation8 [shape = 's32[1]{0}', space=sflag, size = 0x4, scoped, tag = 'scoped memory for tpu_custom_call.1']
    #allocation9 [shape = 'u8[196608]{0}', space=vmem, size = 0x30000, scoped, tag = 'input window, operand 3, single buffered']
    #allocation10 [shape = 'u8[8192]{0}', space=vmem, size = 0x2000, scoped, tag = 'output window, operand 0, single buffered']
    %10 = vsyncpa [#allocation5], 0
    %11 = vsyncpa [#allocation8], 0
    %12 = vsyncpa [#allocation6], 0
    // Predicated region
    $region2: #{tpu_custom_call.1} parent=1 // pred_check
      _
    $region3: #{tpu_custom_call.1} parent=1 // pred_check_branch
      %14 = sbr.rel (0) target = $region5
    $region4: #{tpu_custom_call.1} parent=1 // pred_region
      %s16 = ssub.s32 256, 256
      %17 = vsyncadd [#allocation5], %s16
      %s18 = sshll.u32 [#allocation4], 4
      %s19 = int_to_ptr.vmem [resolvable:$true] %s18
      %24 = dma.hbm_to_vmem [thread:$0]  %s0, 256, %s19, [#allocation5], 128, 128, 8
    $region5: #{tpu_custom_call.1} parent=1 // pred_fallthru
      _
    // Predicated region
    $region6: #{tpu_custom_call.1} parent=1 // pred_check
      _
    $region7: #{tpu_custom_call.1} parent=1 // pred_check_branch
      %26 = sbr.rel (0) target = $region9
    $region8: #{tpu_custom_call.1} parent=1 // pred_region
      %s28 = ssub.s32 2048, 2048
      %29 = vsyncadd [#allocation8], %s28
      %s30 = sshll.u32 [#allocation7], 4
      %s31 = int_to_ptr.vmem [resolvable:$true] %s30
      %36 = dma.hbm_to_vmem [thread:$0]  %s1, 2048, %s31, [#allocation8], 64, 64, 4
    $region9: #{tpu_custom_call.1} parent=1 // pred_fallthru
      _
    // Predicated region
    $region10: #{tpu_custom_call.1} parent=1 // pred_check
      _
    $region11: #{tpu_custom_call.1} parent=1 // pred_check_branch
      %38 = sbr.rel (0) target = $region13
    $region12: #{tpu_custom_call.1} parent=1 // pred_region
      _
    $region13: #{tpu_custom_call.1} parent=1 // pred_fallthru
      _
    // Predicated region
    $region14: #{tpu_custom_call.1} parent=1 // pred_check
      _
    $region15: #{tpu_custom_call.1} parent=1 // pred_check_branch
      %40 = sbr.rel (0) target = $region17
    $region16: #{tpu_custom_call.1} parent=1 // pred_region
      %s42 = ssub.s32 6144, 6144
      %43 = vsyncadd [#allocation8], %s42
      %s44 = sshll.u32 [#allocation9], 4
      %s45 = int_to_ptr.vmem [resolvable:$true] %s44
      %50 = dma.hbm_to_vmem [thread:$0]  %s3, 6144, %s45, [#allocation8], 64, 64, 4
    $region17: #{tpu_custom_call.1} parent=1 // pred_fallthru
      _
    // Predicated region
    $region18: #{tpu_custom_call.1} parent=1 // pred_check
      _
    $region19: #{tpu_custom_call.1} parent=1 // pred_check_branch
      %52 = sbr.rel (0) target = $region21
    $region20: #{tpu_custom_call.1} parent=1 // pred_region
      _
    $region21: #{tpu_custom_call.1} parent=1 // pred_fallthru
      _
    // Predicated region
    $region22: #{tpu_custom_call.1} parent=1 // pred_check
      _
    $region23: #{tpu_custom_call.1} parent=1 // pred_check_branch
      %54 = sbr.rel (0) target = $region25
    $region24: #{tpu_custom_call.1} parent=1 // pred_region
      %55 = dma.done [#allocation5], 256
    $region25: #{tpu_custom_call.1} parent=1 // pred_fallthru
      _
    // Predicated region
    $region26: #{tpu_custom_call.1} parent=1 // pred_check
      _
    $region27: #{tpu_custom_call.1} parent=1 // pred_check_branch
      %57 = sbr.rel (0) target = $region29
    $region28: #{tpu_custom_call.1} parent=1 // pred_region
      %58 = dma.done [#allocation8], 2048
    $region29: #{tpu_custom_call.1} parent=1 // pred_fallthru
      _
    // Predicated region
    $region30: #{tpu_custom_call.1} parent=1 // pred_check
      _
    $region31: #{tpu_custom_call.1} parent=1 // pred_check_branch
      %60 = sbr.rel (0) target = $region33
    $region32: #{tpu_custom_call.1} parent=1 // pred_region
      %61 = dma.done [#allocation8], 6144
    $region33: #{tpu_custom_call.1} parent=1 // pred_fallthru
      _
    %v63 = vld [vmem:[#allocation4] sm:$0xff]
    %v64 = vld [vmem:[#allocation4 + $0x8] sm:$0xff]
    %v65 = vld [vmem:[#allocation7] sm:$0xf]
    %v66 = vld [vmem:[#allocation7 + $0x4] sm:$0xf]
    %v67 = vld [vmem:[#allocation7 + $0x8] sm:$0xf]
    %v68 = vld [vmem:[#allocation7 + $0xc] sm:$0xf]
    %v69 = vld [vmem:[#allocation7 + $0x10] sm:$0xf]
    %v70 = vld [vmem:[#allocation7 + $0x14] sm:$0xf]
    %v71 = vld [vmem:[#allocation7 + $0x18] sm:$0xf]
    %v72 = vld [vmem:[#allocation7 + $0x1c] sm:$0xf]
    %v73 = vld [vmem:[#allocation7 + $0x20] sm:$0xf]
    %v74 = vld [vmem:[#allocation7 + $0x24] sm:$0xf]
    %v75 = vld [vmem:[#allocation7 + $0x28] sm:$0xf]
    %v76 = vld [vmem:[#allocation7 + $0x2c] sm:$0xf]
    %v77 = vld [vmem:[#allocation7 + $0x30] sm:$0xf]
    %v78 = vld [vmem:[#allocation7 + $0x34] sm:$0xf]
    %v79 = vld [vmem:[#allocation7 + $0x38] sm:$0xf]
    %v80 = vld [vmem:[#allocation7 + $0x3c] sm:$0xf]
    %v81 = vld [vmem:[#allocation7 + $0x40] sm:$0xf]
    %v82 = vld [vmem:[#allocation7 + $0x44] sm:$0xf]
    %v83 = vld [vmem:[#allocation7 + $0x48] sm:$0xf]
    %v84 = vld [vmem:[#allocation7 + $0x4c] sm:$0xf]
    %v85 = vld [vmem:[#allocation7 + $0x50] sm:$0xf]
    %v86 = vld [vmem:[#allocation7 + $0x54] sm:$0xf]
    %v87 = vld [vmem:[#allocation7 + $0x58] sm:$0xf]
    %v88 = vld [vmem:[#allocation7 + $0x5c] sm:$0xf]
    %v89 = vld [vmem:[#allocation7 + $0x60] sm:$0xf]
    %v90 = vld [vmem:[#allocation7 + $0x64] sm:$0xf]
    %v91 = vld [vmem:[#allocation7 + $0x68] sm:$0xf]
    %v92 = vld [vmem:[#allocation7 + $0x6c] sm:$0xf]
    %v93 = vld [vmem:[#allocation7 + $0x70] sm:$0xf]
    %v94 = vld [vmem:[#allocation7 + $0x74] sm:$0xf]
    %v95 = vld [vmem:[#allocation7 + $0x78] sm:$0xf]
    %v96 = vld [vmem:[#allocation7 + $0x7c] sm:$0xf]
    %v97 = vld [vmem:[%s2] sm:$0x1]
    %v99 = vlaneseq
    %v100 = vshrl.u32 %v99, 7
    %v101 = vsub.s32 0, %v100
    %v102 = vrot.slane %v97, %v101
    %v106 = vunpack.c.l.b16 %v63
    %v107 = vunpack.c.h.b16 %v63
    %v108 = vunpack.c.l.b16 %v64
    %v109 = vunpack.c.h.b16 %v64
    %v110 = vpack.c.b16 %v108, %v106
    %v111 = vpack.c.b16 %v109, %v107
    %v146 = vunpack.c.l.b16 %v65
    %v147 = vunpack.c.l.b16 %v66
    %v148 = vunpack.c.l.b16 %v67
    %v149 = vunpack.c.l.b16 %v68
    %v150 = vunpack.c.l.b16 %v69
    %v151 = vunpack.c.l.b16 %v70
    %v152 = vunpack.c.l.b16 %v71
    %v153 = vunpack.c.l.b16 %v72
    %v154 = vunpack.c.l.b16 %v73
    %v155 = vunpack.c.l.b16 %v74
    %v156 = vunpack.c.l.b16 %v75
    %v157 = vunpack.c.l.b16 %v76
    %v158 = vunpack.c.l.b16 %v77
    %v159 = vunpack.c.l.b16 %v78
    %v160 = vunpack.c.l.b16 %v79
    %v161 = vunpack.c.l.b16 %v80
    %v162 = vunpack.c.l.b16 %v81
    %v163 = vunpack.c.l.b16 %v82
    %v164 = vunpack.c.l.b16 %v83
    %v165 = vunpack.c.l.b16 %v84
    %v166 = vunpack.c.l.b16 %v85
    %v167 = vunpack.c.l.b16 %v86
    %v168 = vunpack.c.l.b16 %v87
    %v169 = vunpack.c.l.b16 %v88
    %v170 = vunpack.c.l.b16 %v89
    %v171 = vunpack.c.l.b16 %v90
    %v172 = vunpack.c.l.b16 %v91
    %v173 = vunpack.c.l.b16 %v92
    %v174 = vunpack.c.l.b16 %v93
    %v175 = vunpack.c.l.b16 %v94
    %v176 = vunpack.c.l.b16 %v95
    %v177 = vunpack.c.l.b16 %v96
    %v178 = vpack.c.b16 %v147, %v146
    %v179 = vpack.c.b16 %v149, %v148
    %v180 = vpack.c.b16 %v151, %v150
    %v181 = vpack.c.b16 %v153, %v152
    %v182 = vpack.c.b16 %v155, %v154
    %v183 = vpack.c.b16 %v157, %v156
    %v184 = vpack.c.b16 %v159, %v158
    %v185 = vpack.c.b16 %v161, %v160
    %v186 = vpack.c.b16 %v163, %v162
    %v187 = vpack.c.b16 %v165, %v164
    %v188 = vpack.c.b16 %v167, %v166
    %v189 = vpack.c.b16 %v169, %v168
    %v190 = vpack.c.b16 %v171, %v170
    %v191 = vpack.c.b16 %v173, %v172
    %v192 = vpack.c.b16 %v175, %v174
    %v193 = vpack.c.b16 %v177, %v176
    %210 = vmatprep.subr.bf16.mxu0 0
    %211 = vmatpush1.bf16.msra.mxu0 %v178
    %212 = vmatprep.subr.bf16.mxu0 0
    %213 = vmatpush1.bf16.msra.mxu0 %v179
    %214 = vmatprep.subr.bf16.mxu0 0
    %215 = vmatpush1.bf16.msra.mxu0 %v180
    %216 = vmatprep.subr.bf16.mxu0 0
    %217 = vmatpush1.bf16.msra.mxu0 %v181
    %218 = vmatprep.subr.bf16.mxu0 0
    %219 = vmatpush1.bf16.msra.mxu0 %v182
    %220 = vmatprep.subr.bf16.mxu0 0
    %221 = vmatpush1.bf16.msra.mxu0 %v183
    %222 = vmatprep.subr.bf16.mxu0 0
    %223 = vmatpush1.bf16.msra.mxu0 %v184
    %224 = vmatprep.subr.bf16.mxu0 0
    %225 = vmatpush1.bf16.msra.mxu0 %v185
    %226 = vmatprep.subr.bf16.mxu0 0
    %227 = vmatpush1.bf16.msra.mxu0 %v186
    %228 = vmatprep.subr.bf16.mxu0 0
    %229 = vmatpush1.bf16.msra.mxu0 %v187
    %230 = vmatprep.subr.bf16.mxu0 0
    %231 = vmatpush1.bf16.msra.mxu0 %v188
    %232 = vmatprep.subr.bf16.mxu0 0
    %233 = vmatpush1.bf16.msra.mxu0 %v189
    %234 = vmatprep.subr.bf16.mxu0 0
    %235 = vmatpush1.bf16.msra.mxu0 %v190
    %236 = vmatprep.subr.bf16.mxu0 0
    %237 = vmatpush1.bf16.msra.mxu0 %v191
    %238 = vmatprep.subr.bf16.mxu0 0
    %239 = vmatpush1.bf16.msra.mxu0 %v192
    %240 = vmatprep.subr.bf16.mxu0 0
    %241 = vmatpush1.bf16.msra.mxu0 %v193
    %242 = vmatprep.mubr.bf16.mxu0 %v111
    %243 = vmatmul.mubr.bf16.gmra.mrb[0].mxu0 %v110
    %v244 = vpop.f32.mrb[0].mxu0
    %v245 = vadd.f32 %v102, %v244
    %v246 = vpop.f32.mrb[0].mxu0
    %v247 = vpop.f32.mrb[0].mxu0
    %v248 = vadd.f32 %v102, %v247
    %v249 = vpop.f32.mrb[0].mxu0
    %250 = vdwg.mxu0
    %v251 = vtanh.pop %v245
    %v252 = vtanh.pop %v248
    %253 = vst [vmem:[#allocation2] sm:$0xff] %v251
    %254 = vst [vmem:[#allocation2 + $0x8] sm:$0xff] %v252
    %v255 = vld [vmem:[#allocation2] sm:$0xff]
    %v256 = vld [vmem:[#allocation2 + $0x8] sm:$0xff]
    %v257 = vpack.c.bf16 %v256, %v255
    %258 = vst [vmem:[#allocation3] sm:$0xff] %v257
    %v259 = vmul.f32 %v255, 2.0
    %v260 = vmul.f32 %v256, 2.0
    %v261 = vmul.f32 %v259, %v255
    %v262 = vmul.f32 %v260, %v256
    %v263 = vpack.c.bf16 %v262, %v261
    %264 = vst [vmem:[#allocation3 + $0x8] sm:$0xff] %v263
    %v265 = vmul.f32 %v259, %v261
    %v266 = vmul.f32 %v260, %v262
    %v267 = vsub.f32 %v265, %v255
    %v268 = vsub.f32 %v266, %v256
    %v269 = vpack.c.bf16 %v268, %v267
    %270 = vst [vmem:[#allocation3 + $0x10] sm:$0xff] %v269
    %v271 = vmul.f32 %v259, %v267
    %v272 = vmul.f32 %v260, %v268
    %v273 = vsub.f32 %v271, %v261
    %v274 = vsub.f32 %v272, %v262
    %v275 = vpack.c.bf16 %v274, %v273
    %276 = vst [vmem:[#allocation3 + $0x18] sm:$0xff] %v275
    %v277 = vmul.f32 %v259, %v273
    %v278 = vmul.f32 %v260, %v274
    %v279 = vsub.f32 %v277, %v267
    %v280 = vsub.f32 %v278, %v268
    %v281 = vpack.c.bf16 %v280, %v279
    %282 = vst [vmem:[#allocation3 + $0x20] sm:$0xff] %v281
    %v283 = vmul.f32 %v259, %v279
    %v284 = vmul.f32 %v260, %v280
    %v285 = vsub.f32 %v283, %v273
    %v286 = vsub.f32 %v284, %v274
    %v287 = vpack.c.bf16 %v286, %v285
    %288 = vst [vmem:[#allocation3 + $0x28] sm:$0xff] %v287
    %v289 = vld [vmem:[#allocation3] sm:$0xff]
    %v290 = vld [vmem:[#allocation3 + $0x8] sm:$0xff]
    %v291 = vld [vmem:[#allocation3 + $0x10] sm:$0xff]
    %v292 = vld [vmem:[#allocation3 + $0x18] sm:$0xff]
    %v293 = vld [vmem:[#allocation3 + $0x20] sm:$0xff]
    %v294 = vld [vmem:[#allocation3 + $0x28] sm:$0xff]
    %v295 = vld [vmem:[#allocation9] sm:$0xf]
    %v296 = vld [vmem:[#allocation9 + $0x4] sm:$0xf]
    %v297 = vld [vmem:[#allocation9 + $0x8] sm:$0xf]
    %v298 = vld [vmem:[#allocation9 + $0xc] sm:$0xf]
    %v299 = vld [vmem:[#allocation9 + $0x10] sm:$0xf]
    %v300 = vld [vmem:[#allocation9 + $0x14] sm:$0xf]
    %v301 = vld [vmem:[#allocation9 + $0x18] sm:$0xf]
    %v302 = vld [vmem:[#allocation9 + $0x1c] sm:$0xf]
    %v303 = vld [vmem:[#allocation9 + $0x20] sm:$0xf]
    %v304 = vld [vmem:[#allocation9 + $0x24] sm:$0xf]
    %v305 = vld [vmem:[#allocation9 + $0x28] sm:$0xf]
    %v306 = vld [vmem:[#allocation9 + $0x2c] sm:$0xf]
    %v307 = vld [vmem:[#allocation9 + $0x30] sm:$0xf]
    %v308 = vld [vmem:[#allocation9 + $0x34] sm:$0xf]
    %v309 = vld [vmem:[#allocation9 + $0x38] sm:$0xf]
    %v310 = vld [vmem:[#allocation9 + $0x3c] sm:$0xf]
    %v311 = vld [vmem:[#allocation9 + $0x40] sm:$0xf]
    %v312 = vld [vmem:[#allocation9 + $0x44] sm:$0xf]
    %v313 = vld [vmem:[#allocation9 + $0x48] sm:$0xf]
    %v314 = vld [vmem:[#allocation9 + $0x4c] sm:$0xf]
    %v315 = vld [vmem:[#allocation9 + $0x50] sm:$0xf]
    %v316 = vld [vmem:[#allocation9 + $0x54] sm:$0xf]
    %v317 = vld [vmem:[#allocation9 + $0x58] sm:$0xf]
    %v318 = vld [vmem:[#allocation9 + $0x5c] sm:$0xf]
    %v319 = vld [vmem:[#allocation9 + $0x60] sm:$0xf]
    %v320 = vld [vmem:[#allocation9 + $0x64] sm:$0xf]
    %v321 = vld [vmem:[#allocation9 + $0x68] sm:$0xf]
    %v322 = vld [vmem:[#allocation9 + $0x6c] sm:$0xf]
    %v323 = vld [vmem:[#allocation9 + $0x70] sm:$0xf]
    %v324 = vld [vmem:[#allocation9 + $0x74] sm:$0xf]
    %v325 = vld [vmem:[#allocation9 + $0x78] sm:$0xf]
    %v326 = vld [vmem:[#allocation9 + $0x7c] sm:$0xf]
    %v327 = vld [vmem:[#allocation9 + $0x80] sm:$0xf]
    %v328 = vld [vmem:[#allocation9 + $0x84] sm:$0xf]
    %v329 = vld [vmem:[#allocation9 + $0x88] sm:$0xf]
    %v330 = vld [vmem:[#allocation9 + $0x8c] sm:$0xf]
    %v331 = vld [vmem:[#allocation9 + $0x90] sm:$0xf]
    %v332 = vld [vmem:[#allocation9 + $0x94] sm:$0xf]
    %v333 = vld [vmem:[#allocation9 + $0x98] sm:$0xf]
    %v334 = vld [vmem:[#allocation9 + $0x9c] sm:$0xf]
    %v335 = vld [vmem:[#allocation9 + $0xa0] sm:$0xf]
    %v336 = vld [vmem:[#allocation9 + $0xa4] sm:$0xf]
    %v337 = vld [vmem:[#allocation9 + $0xa8] sm:$0xf]
    %v338 = vld [vmem:[#allocation9 + $0xac] sm:$0xf]
    %v339 = vld [vmem:[#allocation9 + $0xb0] sm:$0xf]
    %v340 = vld [vmem:[#allocation9 + $0xb4] sm:$0xf]
    %v341 = vld [vmem:[#allocation9 + $0xb8] sm:$0xf]
    %v342 = vld [vmem:[#allocation9 + $0xbc] sm:$0xf]
    %v343 = vld [vmem:[#allocation9 + $0xc0] sm:$0xf]
    %v344 = vld [vmem:[#allocation9 + $0xc4] sm:$0xf]
    %v345 = vld [vmem:[#allocation9 + $0xc8] sm:$0xf]
    %v346 = vld [vmem:[#allocation9 + $0xcc] sm:$0xf]
    %v347 = vld [vmem:[#allocation9 + $0xd0] sm:$0xf]
    %v348 = vld [vmem:[#allocation9 + $0xd4] sm:$0xf]
    %v349 = vld [vmem:[#allocation9 + $0xd8] sm:$0xf]
    %v350 = vld [vmem:[#allocation9 + $0xdc] sm:$0xf]
    %v351 = vld [vmem:[#allocation9 + $0xe0] sm:$0xf]
    %v352 = vld [vmem:[#allocation9 + $0xe4] sm:$0xf]
    %v353 = vld [vmem:[#allocation9 + $0xe8] sm:$0xf]
    %v354 = vld [vmem:[#allocation9 + $0xec] sm:$0xf]
    %v355 = vld [vmem:[#allocation9 + $0xf0] sm:$0xf]
    %v356 = vld [vmem:[#allocation9 + $0xf4] sm:$0xf]
    %v357 = vld [vmem:[#allocation9 + $0xf8] sm:$0xf]
    %v358 = vld [vmem:[#allocation9 + $0xfc] sm:$0xf]
    %v359 = vld [vmem:[#allocation9 + $0x100] sm:$0xf]
    %v360 = vld [vmem:[#allocation9 + $0x104] sm:$0xf]
    %v361 = vld [vmem:[#allocation9 + $0x108] sm:$0xf]
    %v362 = vld [vmem:[#allocation9 + $0x10c] sm:$0xf]
    %v363 = vld [vmem:[#allocation9 + $0x110] sm:$0xf]
    %v364 = vld [vmem:[#allocation9 + $0x114] sm:$0xf]
    %v365 = vld [vmem:[#allocation9 + $0x118] sm:$0xf]
    %v366 = vld [vmem:[#allocation9 + $0x11c] sm:$0xf]
    %v367 = vld [vmem:[#allocation9 + $0x120] sm:$0xf]
    %v368 = vld [vmem:[#allocation9 + $0x124] sm:$0xf]
    %v369 = vld [vmem:[#allocation9 + $0x128] sm:$0xf]
    %v370 = vld [vmem:[#allocation9 + $0x12c] sm:$0xf]
    %v371 = vld [vmem:[#allocation9 + $0x130] sm:$0xf]
    %v372 = vld [vmem:[#allocation9 + $0x134] sm:$0xf]
    %v373 = vld [vmem:[#allocation9 + $0x138] sm:$0xf]
    %v374 = vld [vmem:[#allocation9 + $0x13c] sm:$0xf]
    %v375 = vld [vmem:[#allocation9 + $0x140] sm:$0xf]
    %v376 = vld [vmem:[#allocation9 + $0x144] sm:$0xf]
    %v377 = vld [vmem:[#allocation9 + $0x148] sm:$0xf]
    %v378 = vld [vmem:[#allocation9 + $0x14c] sm:$0xf]
    %v379 = vld [vmem:[#allocation9 + $0x150] sm:$0xf]
    %v380 = vld [vmem:[#allocation9 + $0x154] sm:$0xf]
    %v381 = vld [vmem:[#allocation9 + $0x158] sm:$0xf]
    %v382 = vld [vmem:[#allocation9 + $0x15c] sm:$0xf]
    %v383 = vld [vmem:[#allocation9 + $0x160] sm:$0xf]
    %v384 = vld [vmem:[#allocation9 + $0x164] sm:$0xf]
    %v385 = vld [vmem:[#allocation9 + $0x168] sm:$0xf]
    %v386 = vld [vmem:[#allocation9 + $0x16c] sm:$0xf]
    %v387 = vld [vmem:[#allocation9 + $0x170] sm:$0xf]
    %v388 = vld [vmem:[#allocation9 + $0x174] sm:$0xf]
    %v389 = vld [vmem:[#allocation9 + $0x178] sm:$0xf]
    %v390 = vld [vmem:[#allocation9 + $0x17c] sm:$0xf]
    %v391 = vld [vmem:[%s4] sm:$0x1]
    %v393 = vlaneseq
    %v394 = vshrl.u32 %v393, 7
    %v395 = vsub.s32 0, %v394
    %v396 = vrot.slane %v391, %v395
    %v494 = vunpack.c.l.b16 %v295
    %v495 = vunpack.c.l.b16 %v296
    %v496 = vunpack.c.l.b16 %v297
    %v497 = vunpack.c.l.b16 %v298
    %v498 = vunpack.c.l.b16 %v299
    %v499 = vunpack.c.l.b16 %v300
    %v500 = vunpack.c.l.b16 %v301
    %v501 = vunpack.c.l.b16 %v302
    %v502 = vunpack.c.l.b16 %v303
    %v503 = vunpack.c.l.b16 %v304
    %v504 = vunpack.c.l.b16 %v305
    %v505 = vunpack.c.l.b16 %v306
    %v506 = vunpack.c.l.b16 %v307
    %v507 = vunpack.c.l.b16 %v308
    %v508 = vunpack.c.l.b16 %v309
    %v509 = vunpack.c.l.b16 %v310
    %v510 = vunpack.c.l.b16 %v311
    %v511 = vunpack.c.l.b16 %v312
    %v512 = vunpack.c.l.b16 %v313
    %v513 = vunpack.c.l.b16 %v314
    %v514 = vunpack.c.l.b16 %v315
    %v515 = vunpack.c.l.b16 %v316
    %v516 = vunpack.c.l.b16 %v317
    %v517 = vunpack.c.l.b16 %v318
    %v518 = vunpack.c.l.b16 %v319
    %v519 = vunpack.c.l.b16 %v320
    %v520 = vunpack.c.l.b16 %v321
    %v521 = vunpack.c.l.b16 %v322
    %v522 = vunpack.c.l.b16 %v323
    %v523 = vunpack.c.l.b16 %v324
    %v524 = vunpack.c.l.b16 %v325
    %v525 = vunpack.c.l.b16 %v326
    %v526 = vunpack.c.l.b16 %v327
    %v527 = vunpack.c.l.b16 %v328
    %v528 = vunpack.c.l.b16 %v329
    %v529 = vunpack.c.l.b16 %v330
    %v530 = vunpack.c.l.b16 %v331
    %v531 = vunpack.c.l.b16 %v332
    %v532 = vunpack.c.l.b16 %v333
    %v533 = vunpack.c.l.b16 %v334
    %v534 = vunpack.c.l.b16 %v335
    %v535 = vunpack.c.l.b16 %v336
    %v536 = vunpack.c.l.b16 %v337
    %v537 = vunpack.c.l.b16 %v338
    %v538 = vunpack.c.l.b16 %v339
    %v539 = vunpack.c.l.b16 %v340
    %v540 = vunpack.c.l.b16 %v341
    %v541 = vunpack.c.l.b16 %v342
    %v542 = vunpack.c.l.b16 %v343
    %v543 = vunpack.c.l.b16 %v344
    %v544 = vunpack.c.l.b16 %v345
    %v545 = vunpack.c.l.b16 %v346
    %v546 = vunpack.c.l.b16 %v347
    %v547 = vunpack.c.l.b16 %v348
    %v548 = vunpack.c.l.b16 %v349
    %v549 = vunpack.c.l.b16 %v350
    %v550 = vunpack.c.l.b16 %v351
    %v551 = vunpack.c.l.b16 %v352
    %v552 = vunpack.c.l.b16 %v353
    %v553 = vunpack.c.l.b16 %v354
    %v554 = vunpack.c.l.b16 %v355
    %v555 = vunpack.c.l.b16 %v356
    %v556 = vunpack.c.l.b16 %v357
    %v557 = vunpack.c.l.b16 %v358
    %v558 = vunpack.c.l.b16 %v359
    %v559 = vunpack.c.l.b16 %v360
    %v560 = vunpack.c.l.b16 %v361
    %v561 = vunpack.c.l.b16 %v362
    %v562 = vunpack.c.l.b16 %v363
    %v563 = vunpack.c.l.b16 %v364
    %v564 = vunpack.c.l.b16 %v365
    %v565 = vunpack.c.l.b16 %v366
    %v566 = vunpack.c.l.b16 %v367
    %v567 = vunpack.c.l.b16 %v368
    %v568 = vunpack.c.l.b16 %v369
    %v569 = vunpack.c.l.b16 %v370
    %v570 = vunpack.c.l.b16 %v371
    %v571 = vunpack.c.l.b16 %v372
    %v572 = vunpack.c.l.b16 %v373
    %v573 = vunpack.c.l.b16 %v374
    %v574 = vunpack.c.l.b16 %v375
    %v575 = vunpack.c.l.b16 %v376
    %v576 = vunpack.c.l.b16 %v377
    %v577 = vunpack.c.l.b16 %v378
    %v578 = vunpack.c.l.b16 %v379
    %v579 = vunpack.c.l.b16 %v380
    %v580 = vunpack.c.l.b16 %v381
    %v581 = vunpack.c.l.b16 %v382
    %v582 = vunpack.c.l.b16 %v383
    %v583 = vunpack.c.l.b16 %v384
    %v584 = vunpack.c.l.b16 %v385
    %v585 = vunpack.c.l.b16 %v386
    %v586 = vunpack.c.l.b16 %v387
    %v587 = vunpack.c.l.b16 %v388
    %v588 = vunpack.c.l.b16 %v389
    %v589 = vunpack.c.l.b16 %v390
    %v590 = vpack.c.b16 %v495, %v494
    %v591 = vpack.c.b16 %v497, %v496
    %v592 = vpack.c.b16 %v499, %v498
    %v593 = vpack.c.b16 %v501, %v500
    %v594 = vpack.c.b16 %v503, %v502
    %v595 = vpack.c.b16 %v505, %v504
    %v596 = vpack.c.b16 %v507, %v506
    %v597 = vpack.c.b16 %v509, %v508
    %v598 = vpack.c.b16 %v511, %v510
    %v599 = vpack.c.b16 %v513, %v512
    %v600 = vpack.c.b16 %v515, %v514
    %v601 = vpack.c.b16 %v517, %v516
    %v602 = vpack.c.b16 %v519, %v518
    %v603 = vpack.c.b16 %v521, %v520
    %v604 = vpack.c.b16 %v523, %v522
    %v605 = vpack.c.b16 %v525, %v524
    %v606 = vpack.c.b16 %v527, %v526
    %v607 = vpack.c.b16 %v529, %v528
    %v608 = vpack.c.b16 %v531, %v530
    %v609 = vpack.c.b16 %v533, %v532
    %v610 = vpack.c.b16 %v535, %v534
    %v611 = vpack.c.b16 %v537, %v536
    %v612 = vpack.c.b16 %v539, %v538
    %v613 = vpack.c.b16 %v541, %v540
    %v614 = vpack.c.b16 %v543, %v542
    %v615 = vpack.c.b16 %v545, %v544
    %v616 = vpack.c.b16 %v547, %v546
    %v617 = vpack.c.b16 %v549, %v548
    %v618 = vpack.c.b16 %v551, %v550
    %v619 = vpack.c.b16 %v553, %v552
    %v620 = vpack.c.b16 %v555, %v554
    %v621 = vpack.c.b16 %v557, %v556
    %v622 = vpack.c.b16 %v559, %v558
    %v623 = vpack.c.b16 %v561, %v560
    %v624 = vpack.c.b16 %v563, %v562
    %v625 = vpack.c.b16 %v565, %v564
    %v626 = vpack.c.b16 %v567, %v566
    %v627 = vpack.c.b16 %v569, %v568
    %v628 = vpack.c.b16 %v571, %v570
    %v629 = vpack.c.b16 %v573, %v572
    %v630 = vpack.c.b16 %v575, %v574
    %v631 = vpack.c.b16 %v577, %v576
    %v632 = vpack.c.b16 %v579, %v578
    %v633 = vpack.c.b16 %v581, %v580
    %v634 = vpack.c.b16 %v583, %v582
    %v635 = vpack.c.b16 %v585, %v584
    %v636 = vpack.c.b16 %v587, %v586
    %v637 = vpack.c.b16 %v589, %v588
    %686 = vmatprep.subr.bf16.mxu0 0
    %687 = vmatpush1.bf16.msra.mxu0 %v590
    %688 = vmatprep.subr.bf16.mxu0 0
    %689 = vmatpush1.bf16.msra.mxu0 %v591
    %690 = vmatprep.subr.bf16.mxu0 0
    %691 = vmatpush1.bf16.msra.mxu0 %v592
    %692 = vmatprep.subr.bf16.mxu0 0
    %693 = vmatpush1.bf16.msra.mxu0 %v593
    %694 = vmatprep.subr.bf16.mxu0 0
    %695 = vmatpush1.bf16.msra.mxu0 %v594
    %696 = vmatprep.subr.bf16.mxu0 0
    %697 = vmatpush1.bf16.msra.mxu0 %v595
    %698 = vmatprep.subr.bf16.mxu0 0
    %699 = vmatpush1.bf16.msra.mxu0 %v596
    %700 = vmatprep.subr.bf16.mxu0 0
    %701 = vmatpush1.bf16.msra.mxu0 %v597
    %702 = vmatprep.subr.bf16.mxu0 0
    %703 = vmatpush1.bf16.msra.mxu0 %v598
    %704 = vmatprep.subr.bf16.mxu0 0
    %705 = vmatpush1.bf16.msra.mxu0 %v599
    %706 = vmatprep.subr.bf16.mxu0 0
    %707 = vmatpush1.bf16.msra.mxu0 %v600
    %708 = vmatprep.subr.bf16.mxu0 0
    %709 = vmatpush1.bf16.msra.mxu0 %v601
    %710 = vmatprep.subr.bf16.mxu0 0
    %711 = vmatpush1.bf16.msra.mxu0 %v602
    %712 = vmatprep.subr.bf16.mxu0 0
    %713 = vmatpush1.bf16.msra.mxu0 %v603
    %714 = vmatprep.subr.bf16.mxu0 0
    %715 = vmatpush1.bf16.msra.mxu0 %v604
    %716 = vmatprep.subr.bf16.mxu0 0
    %717 = vmatpush1.bf16.msra.mxu0 %v605
    %718 = vmatprep.mubr.bf16.mxu0 %v290
    %719 = vmatmul.mubr.bf16.gmra.mrb[0].mxu0 %v289
    %v720 = vpop.f32.mrb[0].mxu0
    %v721 = vadd.f32 %v396, %v720
    %v722 = vpop.f32.mrb[0].mxu0
    %v723 = vpop.f32.mrb[0].mxu0
    %v724 = vadd.f32 %v396, %v723
    %v725 = vpop.f32.mrb[0].mxu0
    %726 = vdwg.mxu0
    %727 = vmatprep.subr.bf16.mxu0 0
    %728 = vmatpush1.bf16.msra.mxu0 %v606
    %729 = vmatprep.subr.bf16.mxu0 0
    %730 = vmatpush1.bf16.msra.mxu0 %v607
    %731 = vmatprep.subr.bf16.mxu0 0
    %732 = vmatpush1.bf16.msra.mxu0 %v608
    %733 = vmatprep.subr.bf16.mxu0 0
    %734 = vmatpush1.bf16.msra.mxu0 %v609
    %735 = vmatprep.subr.bf16.mxu0 0
    %736 = vmatpush1.bf16.msra.mxu0 %v610
    %737 = vmatprep.subr.bf16.mxu0 0
    %738 = vmatpush1.bf16.msra.mxu0 %v611
    %739 = vmatprep.subr.bf16.mxu0 0
    %740 = vmatpush1.bf16.msra.mxu0 %v612
    %741 = vmatprep.subr.bf16.mxu0 0
    %742 = vmatpush1.bf16.msra.mxu0 %v613
    %743 = vmatprep.subr.bf16.mxu0 0
    %744 = vmatpush1.bf16.msra.mxu0 %v614
    %745 = vmatprep.subr.bf16.mxu0 0
    %746 = vmatpush1.bf16.msra.mxu0 %v615
    %747 = vmatprep.subr.bf16.mxu0 0
    %748 = vmatpush1.bf16.msra.mxu0 %v616
    %749 = vmatprep.subr.bf16.mxu0 0
    %750 = vmatpush1.bf16.msra.mxu0 %v617
    %751 = vmatprep.subr.bf16.mxu0 0
    %752 = vmatpush1.bf16.msra.mxu0 %v618
    %753 = vmatprep.subr.bf16.mxu0 0
    %754 = vmatpush1.bf16.msra.mxu0 %v619
    %755 = vmatprep.subr.bf16.mxu0 0
    %756 = vmatpush1.bf16.msra.mxu0 %v620
    %757 = vmatprep.subr.bf16.mxu0 0
    %758 = vmatpush1.bf16.msra.mxu0 %v621
    %759 = vmatprep.mubr.bf16.mxu0 %v292
    %760 = vmatmul.mubr.bf16.gmra.mrb[0].mxu0 %v291
    %v761 = vpop.f32.mrb[0].mxu0
    %v762 = vadd.f32 %v721, %v761
    %v763 = vpop.f32.mrb[0].mxu0
    %v764 = vpop.f32.mrb[0].mxu0
    %v765 = vadd.f32 %v724, %v764
    %v766 = vpop.f32.mrb[0].mxu0
    %767 = vdwg.mxu0
    %768 = vmatprep.subr.bf16.mxu0 0
    %769 = vmatpush1.bf16.msra.mxu0 %v622
    %770 = vmatprep.subr.bf16.mxu0 0
    %771 = vmatpush1.bf16.msra.mxu0 %v623
    %772 = vmatprep.subr.bf16.mxu0 0
    %773 = vmatpush1.bf16.msra.mxu0 %v624
    %774 = vmatprep.subr.bf16.mxu0 0
    %775 = vmatpush1.bf16.msra.mxu0 %v625
    %776 = vmatprep.subr.bf16.mxu0 0
    %777 = vmatpush1.bf16.msra.mxu0 %v626
    %778 = vmatprep.subr.bf16.mxu0 0
    %779 = vmatpush1.bf16.msra.mxu0 %v627
    %780 = vmatprep.subr.bf16.mxu0 0
    %781 = vmatpush1.bf16.msra.mxu0 %v628
    %782 = vmatprep.subr.bf16.mxu0 0
    %783 = vmatpush1.bf16.msra.mxu0 %v629
    %784 = vmatprep.subr.bf16.mxu0 0
    %785 = vmatpush1.bf16.msra.mxu0 %v630
    %786 = vmatprep.subr.bf16.mxu0 0
    %787 = vmatpush1.bf16.msra.mxu0 %v631
    %788 = vmatprep.subr.bf16.mxu0 0
    %789 = vmatpush1.bf16.msra.mxu0 %v632
    %790 = vmatprep.subr.bf16.mxu0 0
    %791 = vmatpush1.bf16.msra.mxu0 %v633
    %792 = vmatprep.subr.bf16.mxu0 0
    %793 = vmatpush1.bf16.msra.mxu0 %v634
    %794 = vmatprep.subr.bf16.mxu0 0
    %795 = vmatpush1.bf16.msra.mxu0 %v635
    %796 = vmatprep.subr.bf16.mxu0 0
    %797 = vmatpush1.bf16.msra.mxu0 %v636
    %798 = vmatprep.subr.bf16.mxu0 0
    %799 = vmatpush1.bf16.msra.mxu0 %v637
    %800 = vmatprep.mubr.bf16.mxu0 %v294
    %801 = vmatmul.mubr.bf16.gmra.mrb[0].mxu0 %v293
    %v802 = vpop.f32.mrb[0].mxu0
    %v803 = vadd.f32 %v762, %v802
    %v804 = vpop.f32.mrb[0].mxu0
    %v805 = vpop.f32.mrb[0].mxu0
    %v806 = vadd.f32 %v765, %v805
    %v807 = vpop.f32.mrb[0].mxu0
    %808 = vdwg.mxu0
    %809 = vst [vmem:[#allocation10] sm:$0xff] %v803
    %810 = vst [vmem:[#allocation10 + $0x8] sm:$0xff] %v806
    // Predicated region
    $region34: #{tpu_custom_call.1} parent=1 // pred_check
      _
    $region35: #{tpu_custom_call.1} parent=1 // pred_check_branch
      %812 = sbr.rel (0) target = $region37
    $region36: #{tpu_custom_call.1} parent=1 // pred_region
      %s814 = ssub.s32 256, 256
      %815 = vsyncadd [#allocation6], %s814
      %s816 = sshll.u32 [#allocation10], 4
      %s817 = int_to_ptr.vmem [resolvable:$true] %s816
      %822 = dma.vmem_to_hbm [thread:$0]  %s817, 256, %s5, [#allocation6], 128, 128, 8
    $region37: #{tpu_custom_call.1} parent=1 // pred_fallthru
      _
    // Predicated region
    $region38: #{tpu_custom_call.1} parent=1 // pred_check
      _
    $region39: #{tpu_custom_call.1} parent=1 // pred_check_branch
      %824 = sbr.rel (0) target = $region41
    $region40: #{tpu_custom_call.1} parent=1 // pred_region
      %825 = dma.done [#allocation6], 256
    $region41: #{tpu_custom_call.1} parent=1 // pred_fallthru
      _
    %826 = vsyncpa [#allocation5], 1
    %827 = vsyncpa [#allocation8], 1
    %828 = vsyncpa [#allocation6], 1

// kernel: tpu_custom_call.1
$region0: #{tpu_custom_call.1}
  #allocation0 [shape = 'u32[]', space=smem, size = 0x4, offset = 0x4, fixed_abs, tag = 'smem constant byte address 0x4 - core index']
  #allocation1 [shape = 'u32[144,128]{1,0:T(1,128)}', space=vmem, size = 0x12000, scoped, tag = 'internal scratch']
  #allocation2 [shape = 'f32[16,128]{1,0:T(8,128)}', space=vmem, size = 0x2000, scoped, tag = 'scratch operand']
  #allocation3 [shape = 'bf16[16,768]{1,0:T(16,128)(2,1)}', space=vmem, size = 0x6000, scoped, tag = 'scratch operand']
  %s0 = inlined_call_operand.hbm [shape: bf16[16,256], index: 0, kind: input, shape index: {}]
  %s1 = inlined_call_operand.hbm [shape: bf16[256,128], index: 1, kind: input, shape index: {}]
  %s2 = inlined_call_operand.vmem [shape: f32[1,128], index: 2, kind: input, shape index: {}]
  %s3 = inlined_call_operand.hbm [shape: bf16[768,128], index: 3, kind: input, shape index: {}]
  %s4 = inlined_call_operand.vmem [shape: f32[1,128], index: 4, kind: input, shape index: {}]
  %s5 = inlined_call_operand.hbm [shape: f32[16,128], index: 5, kind: output, shape index: {}]
  %s6 = sld [smem:[#allocation0]]
  $region42: #{tpu_custom_call.1} parent=0
    _
  %s8 = ssub.s32 1, %s6
  %s9 = scalar_select 0, %s8, %s6
  $region1: #{tpu_custom_call.1} parent=0
    #allocation4 [shape = 'u8[8192]{0}', space=vmem, size = 0x2000, scoped, tag = 'input window, operand 0, single buffered']
    #allocation5 [shape = 's32[1]{0}', space=sflag, size = 0x4, scoped, tag = 'scoped memory for tpu_custom_call.1']
    #allocation6 [shape = 's32[1]{0}', space=sflag, size = 0x4, scoped, tag = 'scoped memory for tpu_custom_call.1']
    #allocation7 [shape = 'u8[65536]{0}', space=vmem, size = 0x10000, scoped, tag = 'input window, operand 1, single buffered']
    #allocation8 [shape = 's32[1]{0}', space=sflag, size = 0x4, scoped, tag = 'scoped memory for tpu_custom_call.1']
    #allocation9 [shape = 'u8[196608]{0}', space=vmem, size = 0x30000, scoped, tag = 'input window, operand 3, single buffered']
    #allocation10 [shape = 'u8[8192]{0}', space=vmem, size = 0x2000, scoped, tag = 'output window, operand 0, single buffered']
    %10 = vsyncpa [#allocation5], 0
    %11 = vsyncpa [#allocation8], 0
    %12 = vsyncpa [#allocation6], 0
    // Predicated region
    $region2: #{tpu_custom_call.1} parent=1 // pred_check
      _
    $region3: #{tpu_custom_call.1} parent=1 // pred_check_branch
      %14 = sbr.rel (0) target = $region5
    $region4: #{tpu_custom_call.1} parent=1 // pred_region
      %s16 = ssub.s32 256, 256
      %17 = vsyncadd [#allocation5], %s16
      %s18 = sshll.u32 [#allocation4], 4
      %s19 = int_to_ptr.vmem [resolvable:$true] %s18
      %24 = dma.hbm_to_vmem [thread:$0]  %s0, 256, %s19, [#allocation5], 128, 128, 8
    $region5: #{tpu_custom_call.1} parent=1 // pred_fallthru
      _
    // Predicated region
    $region6: #{tpu_custom_call.1} parent=1 // pred_check
      _
    $region7: #{tpu_custom_call.1} parent=1 // pred_check_branch
      %26 = sbr.rel (0) target = $region9
    $region8: #{tpu_custom_call.1} parent=1 // pred_region
      %s28 = ssub.s32 2048, 2048
      %29 = vsyncadd [#allocation8], %s28
      %s30 = sshll.u32 [#allocation7], 4
      %s31 = int_to_ptr.vmem [resolvable:$true] %s30
      %36 = dma.hbm_to_vmem [thread:$0]  %s1, 2048, %s31, [#allocation8], 64, 64, 4
    $region9: #{tpu_custom_call.1} parent=1 // pred_fallthru
      _
    // Predicated region
    $region10: #{tpu_custom_call.1} parent=1 // pred_check
      _
    $region11: #{tpu_custom_call.1} parent=1 // pred_check_branch
      %38 = sbr.rel (0) target = $region13
    $region12: #{tpu_custom_call.1} parent=1 // pred_region
      _
    $region13: #{tpu_custom_call.1} parent=1 // pred_fallthru
      _
    // Predicated region
    $region14: #{tpu_custom_call.1} parent=1 // pred_check
      _
    $region15: #{tpu_custom_call.1} parent=1 // pred_check_branch
      %40 = sbr.rel (0) target = $region17
    $region16: #{tpu_custom_call.1} parent=1 // pred_region
      %s42 = ssub.s32 6144, 6144
      %43 = vsyncadd [#allocation8], %s42
      %s44 = sshll.u32 [#allocation9], 4
      %s45 = int_to_ptr.vmem [resolvable:$true] %s44
      %50 = dma.hbm_to_vmem [thread:$0]  %s3, 6144, %s45, [#allocation8], 64, 64, 4
    $region17: #{tpu_custom_call.1} parent=1 // pred_fallthru
      _
    // Predicated region
    $region18: #{tpu_custom_call.1} parent=1 // pred_check
      _
    $region19: #{tpu_custom_call.1} parent=1 // pred_check_branch
      %52 = sbr.rel (0) target = $region21
    $region20: #{tpu_custom_call.1} parent=1 // pred_region
      _
    $region21: #{tpu_custom_call.1} parent=1 // pred_fallthru
      _
    // Predicated region
    $region22: #{tpu_custom_call.1} parent=1 // pred_check
      _
    $region23: #{tpu_custom_call.1} parent=1 // pred_check_branch
      %54 = sbr.rel (0) target = $region25
    $region24: #{tpu_custom_call.1} parent=1 // pred_region
      %55 = dma.done [#allocation5], 256
    $region25: #{tpu_custom_call.1} parent=1 // pred_fallthru
      _
    // Predicated region
    $region26: #{tpu_custom_call.1} parent=1 // pred_check
      _
    $region27: #{tpu_custom_call.1} parent=1 // pred_check_branch
      %57 = sbr.rel (0) target = $region29
    $region28: #{tpu_custom_call.1} parent=1 // pred_region
      %58 = dma.done [#allocation8], 2048
    $region29: #{tpu_custom_call.1} parent=1 // pred_fallthru
      _
    // Predicated region
    $region30: #{tpu_custom_call.1} parent=1 // pred_check
      _
    $region31: #{tpu_custom_call.1} parent=1 // pred_check_branch
      %60 = sbr.rel (0) target = $region33
    $region32: #{tpu_custom_call.1} parent=1 // pred_region
      %61 = dma.done [#allocation8], 6144
    $region33: #{tpu_custom_call.1} parent=1 // pred_fallthru
      _
    %v63 = vld [vmem:[#allocation4] sm:$0xff]
    %v64 = vld [vmem:[#allocation4 + $0x8] sm:$0xff]
    %v65 = vld [vmem:[#allocation7] sm:$0xf]
    %v66 = vld [vmem:[#allocation7 + $0x4] sm:$0xf]
    %v67 = vld [vmem:[#allocation7 + $0x8] sm:$0xf]
    %v68 = vld [vmem:[#allocation7 + $0xc] sm:$0xf]
    %v69 = vld [vmem:[#allocation7 + $0x10] sm:$0xf]
    %v70 = vld [vmem:[#allocation7 + $0x14] sm:$0xf]
    %v71 = vld [vmem:[#allocation7 + $0x18] sm:$0xf]
    %v72 = vld [vmem:[#allocation7 + $0x1c] sm:$0xf]
    %v73 = vld [vmem:[#allocation7 + $0x20] sm:$0xf]
    %v74 = vld [vmem:[#allocation7 + $0x24] sm:$0xf]
    %v75 = vld [vmem:[#allocation7 + $0x28] sm:$0xf]
    %v76 = vld [vmem:[#allocation7 + $0x2c] sm:$0xf]
    %v77 = vld [vmem:[#allocation7 + $0x30] sm:$0xf]
    %v78 = vld [vmem:[#allocation7 + $0x34] sm:$0xf]
    %v79 = vld [vmem:[#allocation7 + $0x38] sm:$0xf]
    %v80 = vld [vmem:[#allocation7 + $0x3c] sm:$0xf]
    %v81 = vld [vmem:[#allocation7 + $0x40] sm:$0xf]
    %v82 = vld [vmem:[#allocation7 + $0x44] sm:$0xf]
    %v83 = vld [vmem:[#allocation7 + $0x48] sm:$0xf]
    %v84 = vld [vmem:[#allocation7 + $0x4c] sm:$0xf]
    %v85 = vld [vmem:[#allocation7 + $0x50] sm:$0xf]
    %v86 = vld [vmem:[#allocation7 + $0x54] sm:$0xf]
    %v87 = vld [vmem:[#allocation7 + $0x58] sm:$0xf]
    %v88 = vld [vmem:[#allocation7 + $0x5c] sm:$0xf]
    %v89 = vld [vmem:[#allocation7 + $0x60] sm:$0xf]
    %v90 = vld [vmem:[#allocation7 + $0x64] sm:$0xf]
    %v91 = vld [vmem:[#allocation7 + $0x68] sm:$0xf]
    %v92 = vld [vmem:[#allocation7 + $0x6c] sm:$0xf]
    %v93 = vld [vmem:[#allocation7 + $0x70] sm:$0xf]
    %v94 = vld [vmem:[#allocation7 + $0x74] sm:$0xf]
    %v95 = vld [vmem:[#allocation7 + $0x78] sm:$0xf]
    %v96 = vld [vmem:[#allocation7 + $0x7c] sm:$0xf]
    %v97 = vld [vmem:[%s2] sm:$0x1]
    %v99 = vlaneseq
    %v100 = vshrl.u32 %v99, 7
    %v101 = vsub.s32 0, %v100
    %v102 = vrot.slane %v97, %v101
    %v106 = vunpack.c.l.b16 %v63
    %v107 = vunpack.c.h.b16 %v63
    %v108 = vunpack.c.l.b16 %v64
    %v109 = vunpack.c.h.b16 %v64
    %v110 = vpack.c.b16 %v108, %v106
    %v111 = vpack.c.b16 %v109, %v107
    %v146 = vunpack.c.l.b16 %v65
    %v147 = vunpack.c.l.b16 %v66
    %v148 = vunpack.c.l.b16 %v67
    %v149 = vunpack.c.l.b16 %v68
    %v150 = vunpack.c.l.b16 %v69
    %v151 = vunpack.c.l.b16 %v70
    %v152 = vunpack.c.l.b16 %v71
    %v153 = vunpack.c.l.b16 %v72
    %v154 = vunpack.c.l.b16 %v73
    %v155 = vunpack.c.l.b16 %v74
    %v156 = vunpack.c.l.b16 %v75
    %v157 = vunpack.c.l.b16 %v76
    %v158 = vunpack.c.l.b16 %v77
    %v159 = vunpack.c.l.b16 %v78
    %v160 = vunpack.c.l.b16 %v79
    %v161 = vunpack.c.l.b16 %v80
    %v162 = vunpack.c.l.b16 %v81
    %v163 = vunpack.c.l.b16 %v82
    %v164 = vunpack.c.l.b16 %v83
    %v165 = vunpack.c.l.b16 %v84
    %v166 = vunpack.c.l.b16 %v85
    %v167 = vunpack.c.l.b16 %v86
    %v168 = vunpack.c.l.b16 %v87
    %v169 = vunpack.c.l.b16 %v88
    %v170 = vunpack.c.l.b16 %v89
    %v171 = vunpack.c.l.b16 %v90
    %v172 = vunpack.c.l.b16 %v91
    %v173 = vunpack.c.l.b16 %v92
    %v174 = vunpack.c.l.b16 %v93
    %v175 = vunpack.c.l.b16 %v94
    %v176 = vunpack.c.l.b16 %v95
    %v177 = vunpack.c.l.b16 %v96
    %v178 = vpack.c.b16 %v147, %v146
    %v179 = vpack.c.b16 %v149, %v148
    %v180 = vpack.c.b16 %v151, %v150
    %v181 = vpack.c.b16 %v153, %v152
    %v182 = vpack.c.b16 %v155, %v154
    %v183 = vpack.c.b16 %v157, %v156
    %v184 = vpack.c.b16 %v159, %v158
    %v185 = vpack.c.b16 %v161, %v160
    %v186 = vpack.c.b16 %v163, %v162
    %v187 = vpack.c.b16 %v165, %v164
    %v188 = vpack.c.b16 %v167, %v166
    %v189 = vpack.c.b16 %v169, %v168
    %v190 = vpack.c.b16 %v171, %v170
    %v191 = vpack.c.b16 %v173, %v172
    %v192 = vpack.c.b16 %v175, %v174
    %v193 = vpack.c.b16 %v177, %v176
    %210 = vmatprep.subr.bf16.mxu0 0
    %211 = vmatpush1.bf16.msra.mxu0 %v178
    %212 = vmatprep.subr.bf16.mxu0 0
    %213 = vmatpush1.bf16.msra.mxu0 %v179
    %214 = vmatprep.subr.bf16.mxu0 0
    %215 = vmatpush1.bf16.msra.mxu0 %v180
    %216 = vmatprep.subr.bf16.mxu0 0
    %217 = vmatpush1.bf16.msra.mxu0 %v181
    %218 = vmatprep.subr.bf16.mxu0 0
    %219 = vmatpush1.bf16.msra.mxu0 %v182
    %220 = vmatprep.subr.bf16.mxu0 0
    %221 = vmatpush1.bf16.msra.mxu0 %v183
    %222 = vmatprep.subr.bf16.mxu0 0
    %223 = vmatpush1.bf16.msra.mxu0 %v184
    %224 = vmatprep.subr.bf16.mxu0 0
    %225 = vmatpush1.bf16.msra.mxu0 %v185
    %226 = vmatprep.subr.bf16.mxu0 0
    %227 = vmatpush1.bf16.msra.mxu0 %v186
    %228 = vmatprep.subr.bf16.mxu0 0
    %229 = vmatpush1.bf16.msra.mxu0 %v187
    %230 = vmatprep.subr.bf16.mxu0 0
    %231 = vmatpush1.bf16.msra.mxu0 %v188
    %232 = vmatprep.subr.bf16.mxu0 0
    %233 = vmatpush1.bf16.msra.mxu0 %v189
    %234 = vmatprep.subr.bf16.mxu0 0
    %235 = vmatpush1.bf16.msra.mxu0 %v190
    %236 = vmatprep.subr.bf16.mxu0 0
    %237 = vmatpush1.bf16.msra.mxu0 %v191
    %238 = vmatprep.subr.bf16.mxu0 0
    %239 = vmatpush1.bf16.msra.mxu0 %v192
    %240 = vmatprep.subr.bf16.mxu0 0
    %241 = vmatpush1.bf16.msra.mxu0 %v193
    %242 = vmatprep.mubr.bf16.mxu0 %v111
    %243 = vmatmul.mubr.bf16.gmra.mrb[0].mxu0 %v110
    %v244 = vpop.f32.mrb[0].mxu0
    %v245 = vadd.f32 %v102, %v244
    %v246 = vpop.f32.mrb[0].mxu0
    %v247 = vpop.f32.mrb[0].mxu0
    %v248 = vadd.f32 %v102, %v247
    %v249 = vpop.f32.mrb[0].mxu0
    %250 = vdwg.mxu0
    %v251 = vtanh.pop %v245
    %v252 = vtanh.pop %v248
    %253 = vst [vmem:[#allocation2] sm:$0xff] %v251
    %254 = vst [vmem:[#allocation2 + $0x8] sm:$0xff] %v252
    %v255 = vld [vmem:[#allocation2] sm:$0xff]
    %v256 = vld [vmem:[#allocation2 + $0x8] sm:$0xff]
    %v257 = vpack.c.bf16 %v256, %v255
    %258 = vst [vmem:[#allocation3] sm:$0xff] %v257
    %v259 = vmul.f32 %v255, 2.0
    %v260 = vmul.f32 %v256, 2.0
    %v261 = vmul.f32 %v259, %v255
    %v262 = vmul.f32 %v260, %v256
    %v263 = vpack.c.bf16 %v262, %v261
    %264 = vst [vmem:[#allocation3 + $0x8] sm:$0xff] %v263
    %v265 = vmul.f32 %v259, %v261
    %v266 = vmul.f32 %v260, %v262
    %v267 = vsub.f32 %v265, %v255
    %v268 = vsub.f32 %v266, %v256
    %v269 = vpack.c.bf16 %v268, %v267
    %270 = vst [vmem:[#allocation3 + $0x10] sm:$0xff] %v269
    %v271 = vmul.f32 %v259, %v267
    %v272 = vmul.f32 %v260, %v268
    %v273 = vsub.f32 %v271, %v261
    %v274 = vsub.f32 %v272, %v262
    %v275 = vpack.c.bf16 %v274, %v273
    %276 = vst [vmem:[#allocation3 + $0x18] sm:$0xff] %v275
    %v277 = vmul.f32 %v259, %v273
    %v278 = vmul.f32 %v260, %v274
    %v279 = vsub.f32 %v277, %v267
    %v280 = vsub.f32 %v278, %v268
    %v281 = vpack.c.bf16 %v280, %v279
    %282 = vst [vmem:[#allocation3 + $0x20] sm:$0xff] %v281
    %v283 = vmul.f32 %v259, %v279
    %v284 = vmul.f32 %v260, %v280
    %v285 = vsub.f32 %v283, %v273
    %v286 = vsub.f32 %v284, %v274
    %v287 = vpack.c.bf16 %v286, %v285
    %288 = vst [vmem:[#allocation3 + $0x28] sm:$0xff] %v287
    %v289 = vld [vmem:[#allocation3] sm:$0xff]
    %v290 = vld [vmem:[#allocation3 + $0x8] sm:$0xff]
    %v291 = vld [vmem:[#allocation3 + $0x10] sm:$0xff]
    %v292 = vld [vmem:[#allocation3 + $0x18] sm:$0xff]
    %v293 = vld [vmem:[#allocation3 + $0x20] sm:$0xff]
    %v294 = vld [vmem:[#allocation3 + $0x28] sm:$0xff]
    %v295 = vld [vmem:[#allocation9] sm:$0xf]
    %v296 = vld [vmem:[#allocation9 + $0x4] sm:$0xf]
    %v297 = vld [vmem:[#allocation9 + $0x8] sm:$0xf]
    %v298 = vld [vmem:[#allocation9 + $0xc] sm:$0xf]
    %v299 = vld [vmem:[#allocation9 + $0x10] sm:$0xf]
    %v300 = vld [vmem:[#allocation9 + $0x14] sm:$0xf]
    %v301 = vld [vmem:[#allocation9 + $0x18] sm:$0xf]
    %v302 = vld [vmem:[#allocation9 + $0x1c] sm:$0xf]
    %v303 = vld [vmem:[#allocation9 + $0x20] sm:$0xf]
    %v304 = vld [vmem:[#allocation9 + $0x24] sm:$0xf]
    %v305 = vld [vmem:[#allocation9 + $0x28] sm:$0xf]
    %v306 = vld [vmem:[#allocation9 + $0x2c] sm:$0xf]
    %v307 = vld [vmem:[#allocation9 + $0x30] sm:$0xf]
    %v308 = vld [vmem:[#allocation9 + $0x34] sm:$0xf]
    %v309 = vld [vmem:[#allocation9 + $0x38] sm:$0xf]
    %v310 = vld [vmem:[#allocation9 + $0x3c] sm:$0xf]
    %v311 = vld [vmem:[#allocation9 + $0x40] sm:$0xf]
    %v312 = vld [vmem:[#allocation9 + $0x44] sm:$0xf]
    %v313 = vld [vmem:[#allocation9 + $0x48] sm:$0xf]
    %v314 = vld [vmem:[#allocation9 + $0x4c] sm:$0xf]
    %v315 = vld [vmem:[#allocation9 + $0x50] sm:$0xf]
    %v316 = vld [vmem:[#allocation9 + $0x54] sm:$0xf]
    %v317 = vld [vmem:[#allocation9 + $0x58] sm:$0xf]
    %v318 = vld [vmem:[#allocation9 + $0x5c] sm:$0xf]
    %v319 = vld [vmem:[#allocation9 + $0x60] sm:$0xf]
    %v320 = vld [vmem:[#allocation9 + $0x64] sm:$0xf]
    %v321 = vld [vmem:[#allocation9 + $0x68] sm:$0xf]
    %v322 = vld [vmem:[#allocation9 + $0x6c] sm:$0xf]
    %v323 = vld [vmem:[#allocation9 + $0x70] sm:$0xf]
    %v324 = vld [vmem:[#allocation9 + $0x74] sm:$0xf]
    %v325 = vld [vmem:[#allocation9 + $0x78] sm:$0xf]
    %v326 = vld [vmem:[#allocation9 + $0x7c] sm:$0xf]
    %v327 = vld [vmem:[#allocation9 + $0x80] sm:$0xf]
    %v328 = vld [vmem:[#allocation9 + $0x84] sm:$0xf]
    %v329 = vld [vmem:[#allocation9 + $0x88] sm:$0xf]
    %v330 = vld [vmem:[#allocation9 + $0x8c] sm:$0xf]
    %v331 = vld [vmem:[#allocation9 + $0x90] sm:$0xf]
    %v332 = vld [vmem:[#allocation9 + $0x94] sm:$0xf]
    %v333 = vld [vmem:[#allocation9 + $0x98] sm:$0xf]
    %v334 = vld [vmem:[#allocation9 + $0x9c] sm:$0xf]
    %v335 = vld [vmem:[#allocation9 + $0xa0] sm:$0xf]
    %v336 = vld [vmem:[#allocation9 + $0xa4] sm:$0xf]
    %v337 = vld [vmem:[#allocation9 + $0xa8] sm:$0xf]
    %v338 = vld [vmem:[#allocation9 + $0xac] sm:$0xf]
    %v339 = vld [vmem:[#allocation9 + $0xb0] sm:$0xf]
    %v340 = vld [vmem:[#allocation9 + $0xb4] sm:$0xf]
    %v341 = vld [vmem:[#allocation9 + $0xb8] sm:$0xf]
    %v342 = vld [vmem:[#allocation9 + $0xbc] sm:$0xf]
    %v343 = vld [vmem:[#allocation9 + $0xc0] sm:$0xf]
    %v344 = vld [vmem:[#allocation9 + $0xc4] sm:$0xf]
    %v345 = vld [vmem:[#allocation9 + $0xc8] sm:$0xf]
    %v346 = vld [vmem:[#allocation9 + $0xcc] sm:$0xf]
    %v347 = vld [vmem:[#allocation9 + $0xd0] sm:$0xf]
    %v348 = vld [vmem:[#allocation9 + $0xd4] sm:$0xf]
    %v349 = vld [vmem:[#allocation9 + $0xd8] sm:$0xf]
    %v350 = vld [vmem:[#allocation9 + $0xdc] sm:$0xf]
    %v351 = vld [vmem:[#allocation9 + $0xe0] sm:$0xf]
    %v352 = vld [vmem:[#allocation9 + $0xe4] sm:$0xf]
    %v353 = vld [vmem:[#allocation9 + $0xe8] sm:$0xf]
    %v354 = vld [vmem:[#allocation9 + $0xec] sm:$0xf]
    %v355 = vld [vmem:[#allocation9 + $0xf0] sm:$0xf]
    %v356 = vld [vmem:[#allocation9 + $0xf4] sm:$0xf]
    %v357 = vld [vmem:[#allocation9 + $0xf8] sm:$0xf]
    %v358 = vld [vmem:[#allocation9 + $0xfc] sm:$0xf]
    %v359 = vld [vmem:[#allocation9 + $0x100] sm:$0xf]
    %v360 = vld [vmem:[#allocation9 + $0x104] sm:$0xf]
    %v361 = vld [vmem:[#allocation9 + $0x108] sm:$0xf]
    %v362 = vld [vmem:[#allocation9 + $0x10c] sm:$0xf]
    %v363 = vld [vmem:[#allocation9 + $0x110] sm:$0xf]
    %v364 = vld [vmem:[#allocation9 + $0x114] sm:$0xf]
    %v365 = vld [vmem:[#allocation9 + $0x118] sm:$0xf]
    %v366 = vld [vmem:[#allocation9 + $0x11c] sm:$0xf]
    %v367 = vld [vmem:[#allocation9 + $0x120] sm:$0xf]
    %v368 = vld [vmem:[#allocation9 + $0x124] sm:$0xf]
    %v369 = vld [vmem:[#allocation9 + $0x128] sm:$0xf]
    %v370 = vld [vmem:[#allocation9 + $0x12c] sm:$0xf]
    %v371 = vld [vmem:[#allocation9 + $0x130] sm:$0xf]
    %v372 = vld [vmem:[#allocation9 + $0x134] sm:$0xf]
    %v373 = vld [vmem:[#allocation9 + $0x138] sm:$0xf]
    %v374 = vld [vmem:[#allocation9 + $0x13c] sm:$0xf]
    %v375 = vld [vmem:[#allocation9 + $0x140] sm:$0xf]
    %v376 = vld [vmem:[#allocation9 + $0x144] sm:$0xf]
    %v377 = vld [vmem:[#allocation9 + $0x148] sm:$0xf]
    %v378 = vld [vmem:[#allocation9 + $0x14c] sm:$0xf]
    %v379 = vld [vmem:[#allocation9 + $0x150] sm:$0xf]
    %v380 = vld [vmem:[#allocation9 + $0x154] sm:$0xf]
    %v381 = vld [vmem:[#allocation9 + $0x158] sm:$0xf]
    %v382 = vld [vmem:[#allocation9 + $0x15c] sm:$0xf]
    %v383 = vld [vmem:[#allocation9 + $0x160] sm:$0xf]
    %v384 = vld [vmem:[#allocation9 + $0x164] sm:$0xf]
    %v385 = vld [vmem:[#allocation9 + $0x168] sm:$0xf]
    %v386 = vld [vmem:[#allocation9 + $0x16c] sm:$0xf]
    %v387 = vld [vmem:[#allocation9 + $0x170] sm:$0xf]
    %v388 = vld [vmem:[#allocation9 + $0x174] sm:$0xf]
    %v389 = vld [vmem:[#allocation9 + $0x178] sm:$0xf]
    %v390 = vld [vmem:[#allocation9 + $0x17c] sm:$0xf]
    %v391 = vld [vmem:[%s4] sm:$0x1]
    %v393 = vlaneseq
    %v394 = vshrl.u32 %v393, 7
    %v395 = vsub.s32 0, %v394
    %v396 = vrot.slane %v391, %v395
    %v494 = vunpack.c.l.b16 %v295
    %v495 = vunpack.c.l.b16 %v296
    %v496 = vunpack.c.l.b16 %v297
    %v497 = vunpack.c.l.b16 %v298
    %v498 = vunpack.c.l.b16 %v299
    %v499 = vunpack.c.l.b16 %v300
    %v500 = vunpack.c.l.b16 %v301
    %v501 = vunpack.c.l.b16 %v302
    %v502 = vunpack.c.l.b16 %v303
    %v503 = vunpack.c.l.b16 %v304
    %v504 = vunpack.c.l.b16 %v305
    %v505 = vunpack.c.l.b16 %v306
    %v506 = vunpack.c.l.b16 %v307
    %v507 = vunpack.c.l.b16 %v308
    %v508 = vunpack.c.l.b16 %v309
    %v509 = vunpack.c.l.b16 %v310
    %v510 = vunpack.c.l.b16 %v311
    %v511 = vunpack.c.l.b16 %v312
    %v512 = vunpack.c.l.b16 %v313
    %v513 = vunpack.c.l.b16 %v314
    %v514 = vunpack.c.l.b16 %v315
    %v515 = vunpack.c.l.b16 %v316
    %v516 = vunpack.c.l.b16 %v317
    %v517 = vunpack.c.l.b16 %v318
    %v518 = vunpack.c.l.b16 %v319
    %v519 = vunpack.c.l.b16 %v320
    %v520 = vunpack.c.l.b16 %v321
    %v521 = vunpack.c.l.b16 %v322
    %v522 = vunpack.c.l.b16 %v323
    %v523 = vunpack.c.l.b16 %v324
    %v524 = vunpack.c.l.b16 %v325
    %v525 = vunpack.c.l.b16 %v326
    %v526 = vunpack.c.l.b16 %v327
    %v527 = vunpack.c.l.b16 %v328
    %v528 = vunpack.c.l.b16 %v329
    %v529 = vunpack.c.l.b16 %v330
    %v530 = vunpack.c.l.b16 %v331
    %v531 = vunpack.c.l.b16 %v332
    %v532 = vunpack.c.l.b16 %v333
    %v533 = vunpack.c.l.b16 %v334
    %v534 = vunpack.c.l.b16 %v335
    %v535 = vunpack.c.l.b16 %v336
    %v536 = vunpack.c.l.b16 %v337
    %v537 = vunpack.c.l.b16 %v338
    %v538 = vunpack.c.l.b16 %v339
    %v539 = vunpack.c.l.b16 %v340
    %v540 = vunpack.c.l.b16 %v341
    %v541 = vunpack.c.l.b16 %v342
    %v542 = vunpack.c.l.b16 %v343
    %v543 = vunpack.c.l.b16 %v344
    %v544 = vunpack.c.l.b16 %v345
    %v545 = vunpack.c.l.b16 %v346
    %v546 = vunpack.c.l.b16 %v347
    %v547 = vunpack.c.l.b16 %v348
    %v548 = vunpack.c.l.b16 %v349
    %v549 = vunpack.c.l.b16 %v350
    %v550 = vunpack.c.l.b16 %v351
    %v551 = vunpack.c.l.b16 %v352
    %v552 = vunpack.c.l.b16 %v353
    %v553 = vunpack.c.l.b16 %v354
    %v554 = vunpack.c.l.b16 %v355
    %v555 = vunpack.c.l.b16 %v356
    %v556 = vunpack.c.l.b16 %v357
    %v557 = vunpack.c.l.b16 %v358
    %v558 = vunpack.c.l.b16 %v359
    %v559 = vunpack.c.l.b16 %v360
    %v560 = vunpack.c.l.b16 %v361
    %v561 = vunpack.c.l.b16 %v362
    %v562 = vunpack.c.l.b16 %v363
    %v563 = vunpack.c.l.b16 %v364
    %v564 = vunpack.c.l.b16 %v365
    %v565 = vunpack.c.l.b16 %v366
    %v566 = vunpack.c.l.b16 %v367
    %v567 = vunpack.c.l.b16 %v368
    %v568 = vunpack.c.l.b16 %v369
    %v569 = vunpack.c.l.b16 %v370
    %v570 = vunpack.c.l.b16 %v371
    %v571 = vunpack.c.l.b16 %v372
    %v572 = vunpack.c.l.b16 %v373
    %v573 = vunpack.c.l.b16 %v374
    %v574 = vunpack.c.l.b16 %v375
    %v575 = vunpack.c.l.b16 %v376
    %v576 = vunpack.c.l.b16 %v377
    %v577 = vunpack.c.l.b16 %v378
    %v578 = vunpack.c.l.b16 %v379
    %v579 = vunpack.c.l.b16 %v380
    %v580 = vunpack.c.l.b16 %v381
    %v581 = vunpack.c.l.b16 %v382
    %v582 = vunpack.c.l.b16 %v383
    %v583 = vunpack.c.l.b16 %v384
    %v584 = vunpack.c.l.b16 %v385
    %v585 = vunpack.c.l.b16 %v386
    %v586 = vunpack.c.l.b16 %v387
    %v587 = vunpack.c.l.b16 %v388
    %v588 = vunpack.c.l.b16 %v389
    %v589 = vunpack.c.l.b16 %v390
    %v590 = vpack.c.b16 %v495, %v494
    %v591 = vpack.c.b16 %v497, %v496
    %v592 = vpack.c.b16 %v499, %v498
    %v593 = vpack.c.b16 %v501, %v500
    %v594 = vpack.c.b16 %v503, %v502
    %v595 = vpack.c.b16 %v505, %v504
    %v596 = vpack.c.b16 %v507, %v506
    %v597 = vpack.c.b16 %v509, %v508
    %v598 = vpack.c.b16 %v511, %v510
    %v599 = vpack.c.b16 %v513, %v512
    %v600 = vpack.c.b16 %v515, %v514
    %v601 = vpack.c.b16 %v517, %v516
    %v602 = vpack.c.b16 %v519, %v518
    %v603 = vpack.c.b16 %v521, %v520
    %v604 = vpack.c.b16 %v523, %v522
    %v605 = vpack.c.b16 %v525, %v524
    %v606 = vpack.c.b16 %v527, %v526
    %v607 = vpack.c.b16 %v529, %v528
    %v608 = vpack.c.b16 %v531, %v530
    %v609 = vpack.c.b16 %v533, %v532
    %v610 = vpack.c.b16 %v535, %v534
    %v611 = vpack.c.b16 %v537, %v536
    %v612 = vpack.c.b16 %v539, %v538
    %v613 = vpack.c.b16 %v541, %v540
    %v614 = vpack.c.b16 %v543, %v542
    %v615 = vpack.c.b16 %v545, %v544
    %v616 = vpack.c.b16 %v547, %v546
    %v617 = vpack.c.b16 %v549, %v548
    %v618 = vpack.c.b16 %v551, %v550
    %v619 = vpack.c.b16 %v553, %v552
    %v620 = vpack.c.b16 %v555, %v554
    %v621 = vpack.c.b16 %v557, %v556
    %v622 = vpack.c.b16 %v559, %v558
    %v623 = vpack.c.b16 %v561, %v560
    %v624 = vpack.c.b16 %v563, %v562
    %v625 = vpack.c.b16 %v565, %v564
    %v626 = vpack.c.b16 %v567, %v566
    %v627 = vpack.c.b16 %v569, %v568
    %v628 = vpack.c.b16 %v571, %v570
    %v629 = vpack.c.b16 %v573, %v572
    %v630 = vpack.c.b16 %v575, %v574
    %v631 = vpack.c.b16 %v577, %v576
    %v632 = vpack.c.b16 %v579, %v578
    %v633 = vpack.c.b16 %v581, %v580
    %v634 = vpack.c.b16 %v583, %v582
    %v635 = vpack.c.b16 %v585, %v584
    %v636 = vpack.c.b16 %v587, %v586
    %v637 = vpack.c.b16 %v589, %v588
    %686 = vmatprep.subr.bf16.mxu0 0
    %687 = vmatpush1.bf16.msra.mxu0 %v590
    %688 = vmatprep.subr.bf16.mxu0 0
    %689 = vmatpush1.bf16.msra.mxu0 %v591
    %690 = vmatprep.subr.bf16.mxu0 0
    %691 = vmatpush1.bf16.msra.mxu0 %v592
    %692 = vmatprep.subr.bf16.mxu0 0
    %693 = vmatpush1.bf16.msra.mxu0 %v593
    %694 = vmatprep.subr.bf16.mxu0 0
    %695 = vmatpush1.bf16.msra.mxu0 %v594
    %696 = vmatprep.subr.bf16.mxu0 0
    %697 = vmatpush1.bf16.msra.mxu0 %v595
    %698 = vmatprep.subr.bf16.mxu0 0
    %699 = vmatpush1.bf16.msra.mxu0 %v596
    %700 = vmatprep.subr.bf16.mxu0 0
    %701 = vmatpush1.bf16.msra.mxu0 %v597
    %702 = vmatprep.subr.bf16.mxu0 0
    %703 = vmatpush1.bf16.msra.mxu0 %v598
    %704 = vmatprep.subr.bf16.mxu0 0
    %705 = vmatpush1.bf16.msra.mxu0 %v599
    %706 = vmatprep.subr.bf16.mxu0 0
    %707 = vmatpush1.bf16.msra.mxu0 %v600
    %708 = vmatprep.subr.bf16.mxu0 0
    %709 = vmatpush1.bf16.msra.mxu0 %v601
    %710 = vmatprep.subr.bf16.mxu0 0
    %711 = vmatpush1.bf16.msra.mxu0 %v602
    %712 = vmatprep.subr.bf16.mxu0 0
    %713 = vmatpush1.bf16.msra.mxu0 %v603
    %714 = vmatprep.subr.bf16.mxu0 0
    %715 = vmatpush1.bf16.msra.mxu0 %v604
    %716 = vmatprep.subr.bf16.mxu0 0
    %717 = vmatpush1.bf16.msra.mxu0 %v605
    %718 = vmatprep.mubr.bf16.mxu0 %v290
    %719 = vmatmul.mubr.bf16.gmra.mrb[0].mxu0 %v289
    %v720 = vpop.f32.mrb[0].mxu0
    %v721 = vadd.f32 %v396, %v720
    %v722 = vpop.f32.mrb[0].mxu0
    %v723 = vpop.f32.mrb[0].mxu0
    %v724 = vadd.f32 %v396, %v723
    %v725 = vpop.f32.mrb[0].mxu0
    %726 = vdwg.mxu0
    %727 = vmatprep.subr.bf16.mxu0 0
    %728 = vmatpush1.bf16.msra.mxu0 %v606
    %729 = vmatprep.subr.bf16.mxu0 0
    %730 = vmatpush1.bf16.msra.mxu0 %v607
    %731 = vmatprep.subr.bf16.mxu0 0
    %732 = vmatpush1.bf16.msra.mxu0 %v608
    %733 = vmatprep.subr.bf16.mxu0 0
    %734 = vmatpush1.bf16.msra.mxu0 %v609
    %735 = vmatprep.subr.bf16.mxu0 0
    %736 = vmatpush1.bf16.msra.mxu0 %v610
    %737 = vmatprep.subr.bf16.mxu0 0
    %738 = vmatpush1.bf16.msra.mxu0 %v611
    %739 = vmatprep.subr.bf16.mxu0 0
    %740 = vmatpush1.bf16.msra.mxu0 %v612
    %741 = vmatprep.subr.bf16.mxu0 0
    %742 = vmatpush1.bf16.msra.mxu0 %v613
    %743 = vmatprep.subr.bf16.mxu0 0
    %744 = vmatpush1.bf16.msra.mxu0 %v614
    %745 = vmatprep.subr.bf16.mxu0 0
    %746 = vmatpush1.bf16.msra.mxu0 %v615
    %747 = vmatprep.subr.bf16.mxu0 0
    %748 = vmatpush1.bf16.msra.mxu0 %v616
    %749 = vmatprep.subr.bf16.mxu0 0
    %750 = vmatpush1.bf16.msra.mxu0 %v617
    %751 = vmatprep.subr.bf16.mxu0 0
    %752 = vmatpush1.bf16.msra.mxu0 %v618
    %753 = vmatprep.subr.bf16.mxu0 0
    %754 = vmatpush1.bf16.msra.mxu0 %v619
    %755 = vmatprep.subr.bf16.mxu0 0
    %756 = vmatpush1.bf16.msra.mxu0 %v620
    %757 = vmatprep.subr.bf16.mxu0 0
    %758 = vmatpush1.bf16.msra.mxu0 %v621
    %759 = vmatprep.mubr.bf16.mxu0 %v292
    %760 = vmatmul.mubr.bf16.gmra.mrb[0].mxu0 %v291
    %v761 = vpop.f32.mrb[0].mxu0
    %v762 = vadd.f32 %v721, %v761
    %v763 = vpop.f32.mrb[0].mxu0
    %v764 = vpop.f32.mrb[0].mxu0
    %v765 = vadd.f32 %v724, %v764
    %v766 = vpop.f32.mrb[0].mxu0
    %767 = vdwg.mxu0
    %768 = vmatprep.subr.bf16.mxu0 0
    %769 = vmatpush1.bf16.msra.mxu0 %v622
    %770 = vmatprep.subr.bf16.mxu0 0
    %771 = vmatpush1.bf16.msra.mxu0 %v623
    %772 = vmatprep.subr.bf16.mxu0 0
    %773 = vmatpush1.bf16.msra.mxu0 %v624
    %774 = vmatprep.subr.bf16.mxu0 0
    %775 = vmatpush1.bf16.msra.mxu0 %v625
    %776 = vmatprep.subr.bf16.mxu0 0
    %777 = vmatpush1.bf16.msra.mxu0 %v626
    %778 = vmatprep.subr.bf16.mxu0 0
    %779 = vmatpush1.bf16.msra.mxu0 %v627
    %780 = vmatprep.subr.bf16.mxu0 0
    %781 = vmatpush1.bf16.msra.mxu0 %v628
    %782 = vmatprep.subr.bf16.mxu0 0
    %783 = vmatpush1.bf16.msra.mxu0 %v629
    %784 = vmatprep.subr.bf16.mxu0 0
    %785 = vmatpush1.bf16.msra.mxu0 %v630
    %786 = vmatprep.subr.bf16.mxu0 0
    %787 = vmatpush1.bf16.msra.mxu0 %v631
    %788 = vmatprep.subr.bf16.mxu0 0
    %789 = vmatpush1.bf16.msra.mxu0 %v632
    %790 = vmatprep.subr.bf16.mxu0 0
    %791 = vmatpush1.bf16.msra.mxu0 %v633
    %792 = vmatprep.subr.bf16.mxu0 0
    %793 = vmatpush1.bf16.msra.mxu0 %v634
    %794 = vmatprep.subr.bf16.mxu0 0
    %795 = vmatpush1.bf16.msra.mxu0 %v635
    %796 = vmatprep.subr.bf16.mxu0 0
    %797 = vmatpush1.bf16.msra.mxu0 %v636
    %798 = vmatprep.subr.bf16.mxu0 0
    %799 = vmatpush1.bf16.msra.mxu0 %v637
    %800 = vmatprep.mubr.bf16.mxu0 %v294
    %801 = vmatmul.mubr.bf16.gmra.mrb[0].mxu0 %v293
    %v802 = vpop.f32.mrb[0].mxu0
    %v803 = vadd.f32 %v762, %v802
    %v804 = vpop.f32.mrb[0].mxu0
    %v805 = vpop.f32.mrb[0].mxu0
    %v806 = vadd.f32 %v765, %v805
    %v807 = vpop.f32.mrb[0].mxu0
    %808 = vdwg.mxu0
    %809 = vst [vmem:[#allocation10] sm:$0xff] %v803
    %810 = vst [vmem:[#allocation10 + $0x8] sm:$0xff] %v806
    // Predicated region
    $region34: #{tpu_custom_call.1} parent=1 // pred_check
      _
    $region35: #{tpu_custom_call.1} parent=1 // pred_check_branch
      %812 = sbr.rel (0) target = $region37
    $region36: #{tpu_custom_call.1} parent=1 // pred_region
      %s814 = ssub.s32 256, 256
      %815 = vsyncadd [#allocation6], %s814
      %s816 = sshll.u32 [#allocation10], 4
      %s817 = int_to_ptr.vmem [resolvable:$true] %s816
      %822 = dma.vmem_to_hbm [thread:$0]  %s817, 256, %s5, [#allocation6], 128, 128, 8
    $region37: #{tpu_custom_call.1} parent=1 // pred_fallthru
      _
    // Predicated region
    $region38: #{tpu_custom_call.1} parent=1 // pred_check
      _
    $region39: #{tpu_custom_call.1} parent=1 // pred_check_branch
      %824 = sbr.rel (0) target = $region41
    $region40: #{tpu_custom_call.1} parent=1 // pred_region
      %825 = dma.done [#allocation6], 256
    $region41: #{tpu_custom_call.1} parent=1 // pred_fallthru
      _
    %826 = vsyncpa [#allocation5], 1
    %827 = vsyncpa [#allocation8], 1
    %828 = vsyncpa [#allocation6], 1

</llo_original>
